<compile_context>
chip_gen: v5e
topology: v5e:2x2
jax: 0.10.0
libtpu: 0.0.40
codegen_flags: <defaults>
</compile_context>

<pallas_src>
import jax
import jax.numpy as jnp
from jax.experimental import pallas as pl
from jax.experimental.pallas import tpu as pltpu

_NEG_INF = -1e30


def _round_up(x, m):
    return (x + m - 1) // m * m


def _cdiv(a, b):
    return -(-a // b)


def _pad_to(x, shape):
    return jnp.pad(x, [(0, s - d) for d, s in zip(x.shape, shape)])


# --------------------------------------------------------------------------
# Kernel
# --------------------------------------------------------------------------
def _simple_baseline_kernel(img_ref, q_ref, w_emb_ref, b_emb_ref,
                            w_img_ref, w_word_ref, b_lin_ref, out_ref):
    # Word-embedding linear on the pre-reduced bag-of-words vector:
    # bf16 MXU matmul, f32 accumulate, f32 bias.
    word = jnp.dot(q_ref[...], w_emb_ref[...],
                   preferred_element_type=jnp.float32) + b_emb_ref[...]

    # Classifier over concat(image, word) == split matmul:
    #   cat([img, word]) @ W == img @ W[:1000] + word @ W[1000:]
    # b_lin carries -inf on lane-padded answer columns (mask baked into the
    # bias; padded weight columns are zero), so no iota/select is needed.
    logits = (jnp.dot(img_ref[...], w_img_ref[...],
                      preferred_element_type=jnp.float32)
              + jnp.dot(word.astype(jnp.bfloat16), w_word_ref[...],
                        preferred_element_type=jnp.float32)
              + b_lin_ref[...])

    # Numerically stable log-softmax over the answer axis (f32 VPU/EUP).
    m = jnp.max(logits, axis=1, keepdims=True)
    shifted = logits - m
    lse = jnp.log(jnp.sum(jnp.exp(shifted), axis=1, keepdims=True))
    out_ref[...] = shifted - lse


# --------------------------------------------------------------------------
# One-time parameter preparation (hoisted out of the per-call path)
# --------------------------------------------------------------------------
def prepare_params(w_emb, b_emb, w_lin, b_lin, img_dim=1000):
    """Transpose PyTorch [out,in] weights to [in,out], zero-pad every matmul
    dimension to a multiple of 128, cast weights to bf16, and bake the
    padded-answer-lane mask into the classifier bias.  Run once."""
    emb, vocab = w_emb.shape
    ans = w_lin.shape[0]

    vocab_p = _round_up(vocab, 128)
    emb_p = _round_up(emb, 128)
    ans_p = _round_up(ans, 128)
    img_p = _round_up(img_dim, 128)          # 1000 -> 1024

    w_emb_t = _pad_to(jnp.transpose(w_emb).astype(jnp.float32),
                      (vocab_p, emb_p)).astype(jnp.bfloat16)
    w_lin_t = jnp.transpose(w_lin).astype(jnp.float32)     # [img+emb, ans]
    w_img_t = _pad_to(w_lin_t[:img_dim, :], (img_p, ans_p)).astype(jnp.bfloat16)
    w_word_t = _pad_to(w_lin_t[img_dim:, :], (emb_p, ans_p)).astype(jnp.bfloat16)
    b_emb_p = _pad_to(b_emb.astype(jnp.float32).reshape(1, emb), (1, emb_p))

    # Padded answer lanes get -inf in the bias; since the corresponding weight
    # columns are zero, their logits are exactly _NEG_INF and vanish from the
    # softmax normalizer.  Identical result to the old in-kernel mask.
    b_lin_p = jnp.full((1, ans_p), _NEG_INF, jnp.float32)
    b_lin_p = b_lin_p.at[0, :ans].set(b_lin.astype(jnp.float32))

    dims = dict(img_dim=img_dim, vocab=vocab, emb=emb, ans=ans,
                img_p=img_p, vocab_p=vocab_p, emb_p=emb_p, ans_p=ans_p)
    params = (w_emb_t, b_emb_p, w_img_t, w_word_t, b_lin_p)
    return params, dims


# --------------------------------------------------------------------------
# Per-generation tuning
# --------------------------------------------------------------------------
def _tpu_tuning():
    """Batch-tile cap and VMEM budget per TPU generation.  Falls back to
    conservative defaults (fit v7x's 64 MiB/TC) if the query is unavailable."""
    tm_cap, vmem_cap = 128, 64 * 1024 * 1024
    try:
        info = pltpu.get_tpu_info()
        vmem_cap = int(info.vmem_capacity_bytes)
        mxu = int(max(getattr(info, "mxu_column_count", 128),
                      getattr(info, "mxu_row_count", 128)))
        # v6e: 128 MiB VMEM + 256-wide MXU -> 256-row batch tiles.
        # v5e keeps 128 (4x128^2 MXU); v7x keeps 128 (64 MiB VMEM/TC).
        if vmem_cap >= 100 * 1024 * 1024 and mxu >= 256:
            tm_cap = 256
    except Exception:
        pass
    vmem_limit = max(min(vmem_cap * 4 // 5, 100 * 1024 * 1024),
                     32 * 1024 * 1024)
    return tm_cap, vmem_limit


def _pick_tm(batch, tm_cap):
    """Balanced batch tiles: avoid a nearly-empty trailing tile and keep the
    grid >= 2 steps when B allows, so v7x's two TensorCores both get work."""
    if batch <= 8:
        return _round_up(max(batch, 1), 8)
    n_tiles = max(2, _cdiv(batch, tm_cap))
    return min(_round_up(_cdiv(batch, n_tiles), 8), tm_cap)


# --------------------------------------------------------------------------
# Forward wrapper
# --------------------------------------------------------------------------
def simple_baseline_forward(image_features, question_encoding, params, dims):
    """image_features: [B, 1000]; question_encoding: [B, seq, vocab].
    Returns [B, ans] log-probabilities (matches the PyTorch forward with
    prepro=True, i.e. precomputed image features)."""
    w_emb_t, b_emb_p, w_img_t, w_word_t, b_lin_p = params
    B = image_features.shape[0]

    img_p, vocab_p = dims["img_p"], dims["vocab_p"]
    emb_p, ans_p = dims["emb_p"], dims["ans_p"]

    tm_cap, vmem_limit = _tpu_tuning()
    tm = _pick_tm(B, tm_cap)
    B_pad = _round_up(B, tm)

    # Bag-of-words pre-reduction over the token axis (torch.sum(q, dim=1)),
    # done once in XLA.  The kernel then streams only [B, vocab_p] in bf16:
    # exact for one-hot / small-count encodings, ~2*seq fewer HBM bytes, and
    # no VMEM blow-up at real vocab sizes.
    q_sum = jnp.sum(question_encoding.astype(jnp.float32), axis=1)
    q_in = _pad_to(q_sum, (B_pad, vocab_p)).astype(jnp.bfloat16)
    img_in = _pad_to(image_features.astype(jnp.float32),
                     (B_pad, img_p)).astype(jnp.bfloat16)

    def build_and_run(weight_buffers):
        def act_spec(shape):
            # Batch-tiled activations: pipelined (double-buffered) DMA.
            return pl.BlockSpec(shape, lambda i: (i, 0))

        def weight_spec(shape):
            # Constant block index -> resident in VMEM across the batch grid.
            idx = lambda i: (0,) * len(shape)
            if weight_buffers is None:
                return pl.BlockSpec(shape, idx)
            # Single-buffer the constant weights: halves resident weight VMEM
            # (critical on v7x, where bf16 weights dominate the 64 MiB/TC).
            return pl.BlockSpec(shape, idx,
                                pipeline_mode=pl.Buffered(weight_buffers))

        return pl.pallas_call(
            _simple_baseline_kernel,
            out_shape=jax.ShapeDtypeStruct((B_pad, ans_p), jnp.float32),
            grid_spec=pltpu.PrefetchScalarGridSpec(
                num_scalar_prefetch=0,
                grid=(B_pad // tm,),
                in_specs=[
                    act_spec((tm, img_p)),
                    act_spec((tm, vocab_p)),
                    weight_spec((vocab_p, emb_p)),
                    weight_spec((1, emb_p)),
                    weight_spec((img_p, ans_p)),
                    weight_spec((emb_p, ans_p)),
                    weight_spec((1, ans_p)),
                ],
                out_specs=pl.BlockSpec((tm, ans_p), lambda i: (i, 0)),
            ),
            compiler_params=pltpu.CompilerParams(
                dimension_semantics=("parallel",),   # megacore batch sharding
                vmem_limit_bytes=vmem_limit,
            ),
        )(img_in, q_in, w_emb_t, b_emb_p, w_img_t, w_word_t, b_lin_p)

    try:
        out = build_and_run(1)
    except Exception:
        # Fallback for jax builds that reject pipeline_mode=pl.Buffered(1):
        # default double-buffering (correct, just uses more VMEM).
        out = build_and_run(None)

    return out[:B, :dims["ans"]]


# --------------------------------------------------------------------------
# References
# --------------------------------------------------------------------------
def _reference_f32(image_features, question_encoding, w_emb, b_emb, w_lin, b_lin):
    q_sum = jnp.sum(question_encoding, axis=1)
    word = q_sum @ w_emb.T + b_emb
    feats = jnp.concatenate([image_features, word], axis=1)
    logits = feats @ w_lin.T + b_lin
    return jax.nn.log_softmax(logits, axis=1)


def _reference_bf16(image_features, question_encoding, w_emb, b_emb, w_lin, b_lin):
    # Emulates the kernel's bf16-weight / bf16-activation MXU numerics with
    # f32 accumulation, for a tight numerical check.
    bf = lambda x: x.astype(jnp.bfloat16)
    img_dim = image_features.shape[1]
    q_sum = jnp.sum(question_encoding, axis=1)
    word = jnp.dot(bf(q_sum), bf(w_emb.T),
                   preferred_element_type=jnp.float32) + b_emb
    w_lin_t = w_lin.T
    logits = (jnp.dot(bf(image_features), bf(w_lin_t[:img_dim]),
                      preferred_element_type=jnp.float32)
              + jnp.dot(bf(word), bf(w_lin_t[img_dim:]),
                        preferred_element_type=jnp.float32)
              + b_lin)
    return jax.nn.log_softmax(logits, axis=1)


# --------------------------------------------------------------------------
# Demo / self-test
# --------------------------------------------------------------------------
if __name__ == "__main__":
    # Small synthetic sizes consistent with the module's forward pass.
    B = 2            # batch
    SEQ = 8          # question length
    VOCAB = 32       # vocab_size
    EMB = 16         # embedding_size
    ANS = 10         # ans_size
    IMG_DIM = 1000   # GoogLeNet output dim (fixed by the architecture)

    key = jax.random.PRNGKey(0)
    k_img, k_q, k_we, k_be, k_wl, k_bl = jax.random.split(key, 6)

    image_features = jax.random.normal(k_img, (B, IMG_DIM), dtype=jnp.float32)
    question_encoding = (
        jax.random.uniform(k_q, (B, SEQ, VOCAB)) > 0.9).astype(jnp.float32)

    w_emb = 0.02 * jax.random.normal(k_we, (EMB, VOCAB), dtype=jnp.float32)
    b_emb = 0.01 * jax.random.normal(k_be, (EMB,), dtype=jnp.float32)
    w_lin = 0.02 * jax.random.normal(k_wl, (ANS, EMB + IMG_DIM),
                                     dtype=jnp.float32)
    b_lin = 0.01 * jax.random.normal(k_bl, (ANS,), dtype=jnp.float32)

    # One-time weight prep (transpose / pad / bf16 cast / bias mask), then run.
    params, dims = prepare_params(w_emb, b_emb, w_lin, b_lin, img_dim=IMG_DIM)
    out = simple_baseline_forward(image_features, question_encoding,
                                  params, dims)
    out = jax.block_until_ready(out)

    ref_bf16 = _reference_bf16(image_features, question_encoding,
                               w_emb, b_emb, w_lin, b_lin)
    ref_f32 = _reference_f32(image_features, question_encoding,
                             w_emb, b_emb, w_lin, b_lin)

    assert out.shape == (B, ANS)
    # Tight check vs a reference with matching bf16/f32-accum numerics.
    assert bool(jnp.allclose(out, ref_bf16, atol=5e-3, rtol=5e-3))
    # Looser semantic check vs the pure-f32 PyTorch-equivalent reference.
    assert bool(jnp.allclose(out, ref_f32, atol=5e-2, rtol=5e-2))

    print("KERNEL_OK")
</pallas_src>

<mosaic_0001>
module attributes {stable_mosaic.version = 11 : i64} {
  func.func @_simple_baseline_kernel(%arg0: i32, %arg1: memref<8x1024xbf16, #tpu.memory_space<vmem>>, %arg2: memref<8x128xbf16, #tpu.memory_space<vmem>>, %arg3: memref<128x128xbf16, #tpu.memory_space<vmem>>, %arg4: memref<1x128xf32, #tpu.memory_space<vmem>>, %arg5: memref<1024x128xbf16, #tpu.memory_space<vmem>>, %arg6: memref<128x128xbf16, #tpu.memory_space<vmem>>, %arg7: memref<1x128xf32, #tpu.memory_space<vmem>>, %arg8: memref<8x128xf32, #tpu.memory_space<vmem>>) attributes {dimension_semantics = [#tpu.dimension_semantics<parallel>], iteration_bounds = array<i64: 1>, scalar_prefetch = 0 : i64, scratch_operands = 0 : i64, tpu.core_type = #tpu.core_type<tc>, window_params = [{transform_indices = @transform_0, window_bounds = array<i64: 8, 1024>}, {transform_indices = @transform_1, window_bounds = array<i64: 8, 128>}, {pipeline_mode = #tpu.pipeline_mode<synchronous>, transform_indices = @transform_2, window_bounds = array<i64: 128, 128>}, {pipeline_mode = #tpu.pipeline_mode<synchronous>, transform_indices = @transform_3, window_bounds = array<i64: 1, 128>}, {pipeline_mode = #tpu.pipeline_mode<synchronous>, transform_indices = @transform_4, window_bounds = array<i64: 1024, 128>}, {pipeline_mode = #tpu.pipeline_mode<synchronous>, transform_indices = @transform_5, window_bounds = array<i64: 128, 128>}, {pipeline_mode = #tpu.pipeline_mode<synchronous>, transform_indices = @transform_6, window_bounds = array<i64: 1, 128>}, {transform_indices = @transform_7, window_bounds = array<i64: 8, 128>}]} {
    %c0 = arith.constant 0 : index
    %c0_0 = arith.constant 0 : index
    %0 = vector.load %arg2[%c0, %c0_0] : memref<8x128xbf16, #tpu.memory_space<vmem>>, vector<8x128xbf16>
    %c0_1 = arith.constant 0 : index
    %c0_2 = arith.constant 0 : index
    %1 = vector.load %arg3[%c0_1, %c0_2] : memref<128x128xbf16, #tpu.memory_space<vmem>>, vector<128x128xbf16>
    %cst = arith.constant dense<0.000000e+00> : vector<8x128xf32>
    %2 = tpu.matmul %0, %1, %cst {dimension_numbers = #tpu.dot_dimension_numbers<[1], [0], [0], [1], [0, 0, 1, 1], [], []>} : vector<8x128xbf16>, vector<128x128xbf16>, vector<8x128xf32> -> vector<8x128xf32>
    %c0_3 = arith.constant 0 : index
    %c0_4 = arith.constant 0 : index
    %3 = vector.load %arg4[%c0_3, %c0_4] : memref<1x128xf32, #tpu.memory_space<vmem>>, vector<1x128xf32>
    %4 = vector.broadcast %3 : vector<1x128xf32> to vector<8x128xf32>
    %5 = arith.addf %2, %4 : vector<8x128xf32>
    %c0_5 = arith.constant 0 : index
    %c0_6 = arith.constant 0 : index
    %6 = vector.load %arg1[%c0_5, %c0_6] : memref<8x1024xbf16, #tpu.memory_space<vmem>>, vector<8x1024xbf16>
    %c0_7 = arith.constant 0 : index
    %c0_8 = arith.constant 0 : index
    %7 = vector.load %arg5[%c0_7, %c0_8] : memref<1024x128xbf16, #tpu.memory_space<vmem>>, vector<1024x128xbf16>
    %cst_9 = arith.constant dense<0.000000e+00> : vector<8x128xf32>
    %8 = tpu.matmul %6, %7, %cst_9 {dimension_numbers = #tpu.dot_dimension_numbers<[1], [0], [0], [1], [0, 0, 1, 1], [], []>} : vector<8x1024xbf16>, vector<1024x128xbf16>, vector<8x128xf32> -> vector<8x128xf32>
    %9 = arith.truncf %5 : vector<8x128xf32> to vector<8x128xbf16>
    %c0_10 = arith.constant 0 : index
    %c0_11 = arith.constant 0 : index
    %10 = vector.load %arg6[%c0_10, %c0_11] : memref<128x128xbf16, #tpu.memory_space<vmem>>, vector<128x128xbf16>
    %cst_12 = arith.constant dense<0.000000e+00> : vector<8x128xf32>
    %11 = tpu.matmul %9, %10, %cst_12 {dimension_numbers = #tpu.dot_dimension_numbers<[1], [0], [0], [1], [0, 0, 1, 1], [], []>} : vector<8x128xbf16>, vector<128x128xbf16>, vector<8x128xf32> -> vector<8x128xf32>
    %12 = arith.addf %8, %11 : vector<8x128xf32>
    %c0_13 = arith.constant 0 : index
    %c0_14 = arith.constant 0 : index
    %13 = vector.load %arg7[%c0_13, %c0_14] : memref<1x128xf32, #tpu.memory_space<vmem>>, vector<1x128xf32>
    %14 = vector.broadcast %13 : vector<1x128xf32> to vector<8x128xf32>
    %15 = arith.addf %12, %14 : vector<8x128xf32>
    %cst_15 = arith.constant dense<0xFF800000> : vector<8xf32>
    %16 = vector.multi_reduction <maximumf>, %15, %cst_15 [1] : vector<8x128xf32> to vector<8xf32>
    %17 = vector.shape_cast %16 : vector<8xf32> to vector<8x1xf32>
    %18 = vector.broadcast %17 : vector<8x1xf32> to vector<8x128xf32>
    %19 = arith.subf %15, %18 : vector<8x128xf32>
    %20 = math.exp %19 : vector<8x128xf32>
    %cst_16 = arith.constant dense<0.000000e+00> : vector<8xf32>
    %21 = vector.multi_reduction <add>, %20, %cst_16 [1] : vector<8x128xf32> to vector<8xf32>
    %22 = vector.shape_cast %21 : vector<8xf32> to vector<8x1xf32>
    %23 = math.log %22 : vector<8x1xf32>
    %24 = vector.broadcast %23 : vector<8x1xf32> to vector<8x128xf32>
    %25 = arith.subf %19, %24 : vector<8x128xf32>
    %c0_17 = arith.constant 0 : index
    %c0_18 = arith.constant 0 : index
    %26 = vector.load %arg8[%c0_17, %c0_18] : memref<8x128xf32, #tpu.memory_space<vmem>>, vector<8x128xf32>
    tpu.vector_store %arg8[%c0_17, %c0_18], %25 {strides = array<i32>} : memref<8x128xf32, #tpu.memory_space<vmem>>, vector<8x128xf32>,
    return
  }
  func.func @transform_0(%arg0: i32) -> (i32, i32) {
    %c0_i32 = arith.constant 0 : i32
    %c0_i32_0 = arith.constant 0 : i32
    return %arg0, %c0_i32 : i32, i32
  }
  func.func @transform_1(%arg0: i32) -> (i32, i32) {
    %c0_i32 = arith.constant 0 : i32
    %c0_i32_0 = arith.constant 0 : i32
    return %arg0, %c0_i32 : i32, i32
  }
  func.func @transform_2(%arg0: i32) -> (i32, i32) {
    %c0_i32 = arith.constant 0 : i32
    %c0_i32_0 = arith.constant 0 : i32
    %c0_i32_1 = arith.constant 0 : i32
    return %c0_i32, %c0_i32_0 : i32, i32
  }
  func.func @transform_3(%arg0: i32) -> (i32, i32) {
    %c0_i32 = arith.constant 0 : i32
    %c0_i32_0 = arith.constant 0 : i32
    %c0_i32_1 = arith.constant 0 : i32
    return %c0_i32, %c0_i32_0 : i32, i32
  }
  func.func @transform_4(%arg0: i32) -> (i32, i32) {
    %c0_i32 = arith.constant 0 : i32
    %c0_i32_0 = arith.constant 0 : i32
    %c0_i32_1 = arith.constant 0 : i32
    return %c0_i32, %c0_i32_0 : i32, i32
  }
  func.func @transform_5(%arg0: i32) -> (i32, i32) {
    %c0_i32 = arith.constant 0 : i32
    %c0_i32_0 = arith.constant 0 : i32
    %c0_i32_1 = arith.constant 0 : i32
    return %c0_i32, %c0_i32_0 : i32, i32
  }
  func.func @transform_6(%arg0: i32) -> (i32, i32) {
    %c0_i32 = arith.constant 0 : i32
    %c0_i32_0 = arith.constant 0 : i32
    %c0_i32_1 = arith.constant 0 : i32
    return %c0_i32, %c0_i32_0 : i32, i32
  }
  func.func @transform_7(%arg0: i32) -> (i32, i32) {
    %c0_i32 = arith.constant 0 : i32
    %c0_i32_0 = arith.constant 0 : i32
    return %arg0, %c0_i32 : i32, i32
  }
}

module attributes {stable_mosaic.version = 11 : i64} {
  func.func @_simple_baseline_kernel(%arg0: i32, %arg1: memref<8x1024xbf16, #tpu.memory_space<vmem>>, %arg2: memref<8x128xbf16, #tpu.memory_space<vmem>>, %arg3: memref<128x128xbf16, #tpu.memory_space<vmem>>, %arg4: memref<1x128xf32, #tpu.memory_space<vmem>>, %arg5: memref<1024x128xbf16, #tpu.memory_space<vmem>>, %arg6: memref<128x128xbf16, #tpu.memory_space<vmem>>, %arg7: memref<1x128xf32, #tpu.memory_space<vmem>>, %arg8: memref<8x128xf32, #tpu.memory_space<vmem>>) attributes {dimension_semantics = [#tpu.dimension_semantics<parallel>], iteration_bounds = array<i64: 1>, scalar_prefetch = 0 : i64, scratch_operands = 0 : i64, tpu.core_type = #tpu.core_type<tc>, window_params = [{transform_indices = @transform_0, window_bounds = array<i64: 8, 1024>}, {transform_indices = @transform_1, window_bounds = array<i64: 8, 128>}, {pipeline_mode = #tpu.pipeline_mode<synchronous>, transform_indices = @transform_2, window_bounds = array<i64: 128, 128>}, {pipeline_mode = #tpu.pipeline_mode<synchronous>, transform_indices = @transform_3, window_bounds = array<i64: 1, 128>}, {pipeline_mode = #tpu.pipeline_mode<synchronous>, transform_indices = @transform_4, window_bounds = array<i64: 1024, 128>}, {pipeline_mode = #tpu.pipeline_mode<synchronous>, transform_indices = @transform_5, window_bounds = array<i64: 128, 128>}, {pipeline_mode = #tpu.pipeline_mode<synchronous>, transform_indices = @transform_6, window_bounds = array<i64: 1, 128>}, {transform_indices = @transform_7, window_bounds = array<i64: 8, 128>}]} {
    %c0 = arith.constant 0 : index
    %c0_0 = arith.constant 0 : index
    %0 = vector.load %arg2[%c0, %c0_0] : memref<8x128xbf16, #tpu.memory_space<vmem>>, vector<8x128xbf16>
    %c0_1 = arith.constant 0 : index
    %c0_2 = arith.constant 0 : index
    %1 = vector.load %arg3[%c0_1, %c0_2] : memref<128x128xbf16, #tpu.memory_space<vmem>>, vector<128x128xbf16>
    %cst = arith.constant dense<0.000000e+00> : vector<8x128xf32>
    %2 = tpu.matmul %0, %1, %cst {dimension_numbers = #tpu.dot_dimension_numbers<[1], [0], [0], [1], [0, 0, 1, 1], [], []>} : vector<8x128xbf16>, vector<128x128xbf16>, vector<8x128xf32> -> vector<8x128xf32>
    %c0_3 = arith.constant 0 : index
    %c0_4 = arith.constant 0 : index
    %3 = vector.load %arg4[%c0_3, %c0_4] : memref<1x128xf32, #tpu.memory_space<vmem>>, vector<1x128xf32>
    %4 = vector.broadcast %3 : vector<1x128xf32> to vector<8x128xf32>
    %5 = arith.addf %2, %4 : vector<8x128xf32>
    %c0_5 = arith.constant 0 : index
    %c0_6 = arith.constant 0 : index
    %6 = vector.load %arg1[%c0_5, %c0_6] : memref<8x1024xbf16, #tpu.memory_space<vmem>>, vector<8x1024xbf16>
    %c0_7 = arith.constant 0 : index
    %c0_8 = arith.constant 0 : index
    %7 = vector.load %arg5[%c0_7, %c0_8] : memref<1024x128xbf16, #tpu.memory_space<vmem>>, vector<1024x128xbf16>
    %cst_9 = arith.constant dense<0.000000e+00> : vector<8x128xf32>
    %8 = tpu.matmul %6, %7, %cst_9 {dimension_numbers = #tpu.dot_dimension_numbers<[1], [0], [0], [1], [0, 0, 1, 1], [], []>} : vector<8x1024xbf16>, vector<1024x128xbf16>, vector<8x128xf32> -> vector<8x128xf32>
    %9 = arith.truncf %5 : vector<8x128xf32> to vector<8x128xbf16>
    %c0_10 = arith.constant 0 : index
    %c0_11 = arith.constant 0 : index
    %10 = vector.load %arg6[%c0_10, %c0_11] : memref<128x128xbf16, #tpu.memory_space<vmem>>, vector<128x128xbf16>
    %cst_12 = arith.constant dense<0.000000e+00> : vector<8x128xf32>
    %11 = tpu.matmul %9, %10, %cst_12 {dimension_numbers = #tpu.dot_dimension_numbers<[1], [0], [0], [1], [0, 0, 1, 1], [], []>} : vector<8x128xbf16>, vector<128x128xbf16>, vector<8x128xf32> -> vector<8x128xf32>
    %12 = arith.addf %8, %11 : vector<8x128xf32>
    %c0_13 = arith.constant 0 : index
    %c0_14 = arith.constant 0 : index
    %13 = vector.load %arg7[%c0_13, %c0_14] : memref<1x128xf32, #tpu.memory_space<vmem>>, vector<1x128xf32>
    %14 = vector.broadcast %13 : vector<1x128xf32> to vector<8x128xf32>
    %15 = arith.addf %12, %14 : vector<8x128xf32>
    %cst_15 = arith.constant dense<0xFF800000> : vector<8xf32>
    %16 = vector.multi_reduction <maximumf>, %15, %cst_15 [1] : vector<8x128xf32> to vector<8xf32>
    %17 = vector.shape_cast %16 : vector<8xf32> to vector<8x1xf32>
    %18 = vector.broadcast %17 : vector<8x1xf32> to vector<8x128xf32>
    %19 = arith.subf %15, %18 : vector<8x128xf32>
    %20 = math.exp %19 : vector<8x128xf32>
    %cst_16 = arith.constant dense<0.000000e+00> : vector<8xf32>
    %21 = vector.multi_reduction <add>, %20, %cst_16 [1] : vector<8x128xf32> to vector<8xf32>
    %22 = vector.shape_cast %21 : vector<8xf32> to vector<8x1xf32>
    %23 = math.log %22 : vector<8x1xf32>
    %24 = vector.broadcast %23 : vector<8x1xf32> to vector<8x128xf32>
    %25 = arith.subf %19, %24 : vector<8x128xf32>
    %c0_17 = arith.constant 0 : index
    %c0_18 = arith.constant 0 : index
    %26 = vector.load %arg8[%c0_17, %c0_18] : memref<8x128xf32, #tpu.memory_space<vmem>>, vector<8x128xf32>
    tpu.vector_store %arg8[%c0_17, %c0_18], %25 {strides = array<i32>} : memref<8x128xf32, #tpu.memory_space<vmem>>, vector<8x128xf32>,
    return
  }
  func.func @transform_0(%arg0: i32) -> (i32, i32) {
    %c0_i32 = arith.constant 0 : i32
    %c0_i32_0 = arith.constant 0 : i32
    return %arg0, %c0_i32 : i32, i32
  }
  func.func @transform_1(%arg0: i32) -> (i32, i32) {
    %c0_i32 = arith.constant 0 : i32
    %c0_i32_0 = arith.constant 0 : i32
    return %arg0, %c0_i32 : i32, i32
  }
  func.func @transform_2(%arg0: i32) -> (i32, i32) {
    %c0_i32 = arith.constant 0 : i32
    %c0_i32_0 = arith.constant 0 : i32
    %c0_i32_1 = arith.constant 0 : i32
    return %c0_i32, %c0_i32_0 : i32, i32
  }
  func.func @transform_3(%arg0: i32) -> (i32, i32) {
    %c0_i32 = arith.constant 0 : i32
    %c0_i32_0 = arith.constant 0 : i32
    %c0_i32_1 = arith.constant 0 : i32
    return %c0_i32, %c0_i32_0 : i32, i32
  }
  func.func @transform_4(%arg0: i32) -> (i32, i32) {
    %c0_i32 = arith.constant 0 : i32
    %c0_i32_0 = arith.constant 0 : i32
    %c0_i32_1 = arith.constant 0 : i32
    return %c0_i32, %c0_i32_0 : i32, i32
  }
  func.func @transform_5(%arg0: i32) -> (i32, i32) {
    %c0_i32 = arith.constant 0 : i32
    %c0_i32_0 = arith.constant 0 : i32
    %c0_i32_1 = arith.constant 0 : i32
    return %c0_i32, %c0_i32_0 : i32, i32
  }
  func.func @transform_6(%arg0: i32) -> (i32, i32) {
    %c0_i32 = arith.constant 0 : i32
    %c0_i32_0 = arith.constant 0 : i32
    %c0_i32_1 = arith.constant 0 : i32
    return %c0_i32, %c0_i32_0 : i32, i32
  }
  func.func @transform_7(%arg0: i32) -> (i32, i32) {
    %c0_i32 = arith.constant 0 : i32
    %c0_i32_0 = arith.constant 0 : i32
    return %arg0, %c0_i32 : i32, i32
  }
}

</mosaic_0001>

<llo_original>
// kernel: tpu_custom_call.1
$region0: #{tpu_custom_call.1}
  #allocation0 [shape = 'u32[]', space=smem, size = 0x4, offset = 0x4, fixed_abs, tag = 'smem constant byte address 0x4 - core index']
  #allocation1 [shape = 'u32[72,128]{1,0:T(1,128)}', space=vmem, size = 0x9000, scoped, tag = 'internal scratch']
  %s0 = inlined_call_operand.hbm [shape: bf16[8,1024], index: 0, kind: input, shape index: {}]
  %s1 = inlined_call_operand.hbm [shape: bf16[8,128], index: 1, kind: input, shape index: {}]
  %s2 = inlined_call_operand.hbm [shape: bf16[128,128], index: 2, kind: input, shape index: {}]
  %s3 = inlined_call_operand.vmem [shape: f32[1,128], index: 3, kind: input, shape index: {}]
  %s4 = inlined_call_operand.hbm [shape: bf16[1024,128], index: 4, kind: input, shape index: {}]
  %s5 = inlined_call_operand.hbm [shape: bf16[128,128], index: 5, kind: input, shape index: {}]
  %s6 = inlined_call_operand.vmem [shape: f32[1,128], index: 6, kind: input, shape index: {}]
  %s7 = inlined_call_operand.hbm [shape: f32[8,128], index: 7, kind: output, shape index: {}]
  %s8 = sld [smem:[#allocation0]]
  $region58: #{tpu_custom_call.1} parent=0
    _
  %s10 = ssub.s32 1, %s8
  %s11 = scalar_select 0, %s10, %s8
  $region1: #{tpu_custom_call.1} parent=0
    #allocation2 [shape = 'u8[16384]{0}', space=vmem, size = 0x4000, scoped, tag = 'input window, operand 0, single buffered']
    #allocation3 [shape = 's32[1]{0}', space=sflag, size = 0x4, scoped, tag = 'scoped memory for tpu_custom_call.1']
    #allocation4 [shape = 's32[1]{0}', space=sflag, size = 0x4, scoped, tag = 'scoped memory for tpu_custom_call.1']
    #allocation5 [shape = 'u8[2048]{0}', space=vmem, size = 0x800, scoped, tag = 'input window, operand 1, single buffered']
    #allocation6 [shape = 's32[1]{0}', space=sflag, size = 0x4, scoped, tag = 'scoped memory for tpu_custom_call.1']
    #allocation7 [shape = 'u8[32768]{0}', space=vmem, size = 0x8000, scoped, tag = 'input window, operand 2, single buffered']
    #allocation8 [shape = 'u8[262144]{0}', space=vmem, size = 0x40000, scoped, tag = 'input window, operand 4, single buffered']
    #allocation9 [shape = 's32[1]{0}', space=sflag, size = 0x4, scoped, tag = 'scoped memory for tpu_custom_call.1']
    #allocation10 [shape = 'u8[32768]{0}', space=vmem, size = 0x8000, scoped, tag = 'input window, operand 5, single buffered']
    #allocation11 [shape = 'u8[4096]{0}', space=vmem, size = 0x1000, scoped, tag = 'output window, operand 0, single buffered']
    %12 = vsyncpa [#allocation3], 0
    %13 = vsyncpa [#allocation6], 0
    %14 = vsyncpa [#allocation9], 0
    %15 = vsyncpa [#allocation4], 0
    // Predicated region
    $region2: #{tpu_custom_call.1} parent=1 // pred_check
      _
    $region3: #{tpu_custom_call.1} parent=1 // pred_check_branch
      %17 = sbr.rel (0) target = $region5
    $region4: #{tpu_custom_call.1} parent=1 // pred_region
      %19 = vsyncadd [#allocation3], 0
      %s21 = sshll.u32 %s0, 4
      %s22 = int_to_ptr.hbm [resolvable:$true] %s21
      %s23 = sshll.u32 [#allocation2], 4
      %s24 = int_to_ptr.vmem [resolvable:$true] %s23
      %26 = dma.hbm_to_vmem [thread:$0]  %s22, 512, %s24, [#allocation3]
    $region5: #{tpu_custom_call.1} parent=1 // pred_fallthru
      _
    // Predicated region
    $region6: #{tpu_custom_call.1} parent=1 // pred_check
      _
    $region7: #{tpu_custom_call.1} parent=1 // pred_check_branch
      %28 = sbr.rel (0) target = $region9
    $region8: #{tpu_custom_call.1} parent=1 // pred_region
      %30 = vsyncadd [#allocation6], 0
      %s32 = sshll.u32 %s1, 4
      %s33 = int_to_ptr.hbm [resolvable:$true] %s32
      %s34 = sshll.u32 [#allocation5], 4
      %s35 = int_to_ptr.vmem [resolvable:$true] %s34
      %37 = dma.hbm_to_vmem [thread:$0]  %s33, 64, %s35, [#allocation6]
    $region9: #{tpu_custom_call.1} parent=1 // pred_fallthru
      _
    // Predicated region
    $region10: #{tpu_custom_call.1} parent=1 // pred_check
      _
    $region11: #{tpu_custom_call.1} parent=1 // pred_check_branch
      %39 = sbr.rel (0) target = $region13
    $region12: #{tpu_custom_call.1} parent=1 // pred_region
      %41 = vsyncadd [#allocation6], 0
      %s42 = sshll.u32 %s2, 4
      %s43 = int_to_ptr.hbm [resolvable:$true] %s42
      %s44 = sshll.u32 [#allocation7], 4
      %s45 = int_to_ptr.vmem [resolvable:$true] %s44
      %50 = dma.hbm_to_vmem [thread:$0]  %s43, 1024, %s45, [#allocation6], 64, 64, 4
    $region13: #{tpu_custom_call.1} parent=1 // pred_fallthru
      _
    // Predicated region
    $region14: #{tpu_custom_call.1} parent=1 // pred_check
      _
    $region15: #{tpu_custom_call.1} parent=1 // pred_check_branch
      %52 = sbr.rel (0) target = $region17
    $region16: #{tpu_custom_call.1} parent=1 // pred_region
      _
    $region17: #{tpu_custom_call.1} parent=1 // pred_fallthru
      _
    // Predicated region
    $region18: #{tpu_custom_call.1} parent=1 // pred_check
      _
    $region19: #{tpu_custom_call.1} parent=1 // pred_check_branch
      %54 = sbr.rel (0) target = $region21
    $region20: #{tpu_custom_call.1} parent=1 // pred_region
      %56 = vsyncadd [#allocation9], 0
      %s57 = sshll.u32 %s4, 4
      %s58 = int_to_ptr.hbm [resolvable:$true] %s57
      %s59 = sshll.u32 [#allocation8], 4
      %s60 = int_to_ptr.vmem [resolvable:$true] %s59
      %65 = dma.hbm_to_vmem [thread:$0]  %s58, 8192, %s60, [#allocation9], 64, 64, 4
    $region21: #{tpu_custom_call.1} parent=1 // pred_fallthru
      _
    // Predicated region
    $region22: #{tpu_custom_call.1} parent=1 // pred_check
      _
    $region23: #{tpu_custom_call.1} parent=1 // pred_check_branch
      %67 = sbr.rel (0) target = $region25
    $region24: #{tpu_custom_call.1} parent=1 // pred_region
      %69 = vsyncadd [#allocation9], 0
      %s70 = sshll.u32 %s5, 4
      %s71 = int_to_ptr.hbm [resolvable:$true] %s70
      %s72 = sshll.u32 [#allocation10], 4
      %s73 = int_to_ptr.vmem [resolvable:$true] %s72
      %78 = dma.hbm_to_vmem [thread:$0]  %s71, 1024, %s73, [#allocation9], 64, 64, 4
    $region25: #{tpu_custom_call.1} parent=1 // pred_fallthru
      _
    // Predicated region
    $region26: #{tpu_custom_call.1} parent=1 // pred_check
      _
    $region27: #{tpu_custom_call.1} parent=1 // pred_check_branch
      %80 = sbr.rel (0) target = $region29
    $region28: #{tpu_custom_call.1} parent=1 // pred_region
      _
    $region29: #{tpu_custom_call.1} parent=1 // pred_fallthru
      _
    // Predicated region
    $region30: #{tpu_custom_call.1} parent=1 // pred_check
      _
    $region31: #{tpu_custom_call.1} parent=1 // pred_check_branch
      %82 = sbr.rel (0) target = $region33
    $region32: #{tpu_custom_call.1} parent=1 // pred_region
      %84 = dma.done [#allocation3], 512
    $region33: #{tpu_custom_call.1} parent=1 // pred_fallthru
      _
    // Predicated region
    $region34: #{tpu_custom_call.1} parent=1 // pred_check
      _
    $region35: #{tpu_custom_call.1} parent=1 // pred_check_branch
      %86 = sbr.rel (0) target = $region37
    $region36: #{tpu_custom_call.1} parent=1 // pred_region
      %88 = dma.done [#allocation6], 64
    $region37: #{tpu_custom_call.1} parent=1 // pred_fallthru
      _
    // Predicated region
    $region38: #{tpu_custom_call.1} parent=1 // pred_check
      _
    $region39: #{tpu_custom_call.1} parent=1 // pred_check_branch
      %90 = sbr.rel (0) target = $region41
    $region40: #{tpu_custom_call.1} parent=1 // pred_region
      %92 = dma.done [#allocation6], 1024
    $region41: #{tpu_custom_call.1} parent=1 // pred_fallthru
      _
    // Predicated region
    $region42: #{tpu_custom_call.1} parent=1 // pred_check
      _
    $region43: #{tpu_custom_call.1} parent=1 // pred_check_branch
      %94 = sbr.rel (0) target = $region45
    $region44: #{tpu_custom_call.1} parent=1 // pred_region
      %96 = dma.done [#allocation9], 8192
    $region45: #{tpu_custom_call.1} parent=1 // pred_fallthru
      _
    // Predicated region
    $region46: #{tpu_custom_call.1} parent=1 // pred_check
      _
    $region47: #{tpu_custom_call.1} parent=1 // pred_check_branch
      %98 = sbr.rel (0) target = $region49
    $region48: #{tpu_custom_call.1} parent=1 // pred_region
      %100 = dma.done [#allocation9], 1024
    $region49: #{tpu_custom_call.1} parent=1 // pred_fallthru
      _
    %v101 = vld [vmem:[#allocation5] sm:$0xf]
    %v102 = vld [vmem:[#allocation7] sm:$0xf]
    %v103 = vld [vmem:[#allocation7 + $0x4] sm:$0xf]
    %v104 = vld [vmem:[#allocation7 + $0x8] sm:$0xf]
    %v105 = vld [vmem:[#allocation7 + $0xc] sm:$0xf]
    %v106 = vld [vmem:[#allocation7 + $0x10] sm:$0xf]
    %v107 = vld [vmem:[#allocation7 + $0x14] sm:$0xf]
    %v108 = vld [vmem:[#allocation7 + $0x18] sm:$0xf]
    %v109 = vld [vmem:[#allocation7 + $0x1c] sm:$0xf]
    %v110 = vld [vmem:[#allocation7 + $0x20] sm:$0xf]
    %v111 = vld [vmem:[#allocation7 + $0x24] sm:$0xf]
    %v112 = vld [vmem:[#allocation7 + $0x28] sm:$0xf]
    %v113 = vld [vmem:[#allocation7 + $0x2c] sm:$0xf]
    %v114 = vld [vmem:[#allocation7 + $0x30] sm:$0xf]
    %v115 = vld [vmem:[#allocation7 + $0x34] sm:$0xf]
    %v116 = vld [vmem:[#allocation7 + $0x38] sm:$0xf]
    %v117 = vld [vmem:[#allocation7 + $0x3c] sm:$0xf]
    %v118 = vld [vmem:[%s3] sm:$0x1]
    %v120 = vperm.slane %v118, 0
    %v138 = vunpack.c.l.b16 %v102
    %v139 = vunpack.c.l.b16 %v103
    %v140 = vunpack.c.l.b16 %v104
    %v141 = vunpack.c.l.b16 %v105
    %v142 = vunpack.c.l.b16 %v106
    %v143 = vunpack.c.l.b16 %v107
    %v144 = vunpack.c.l.b16 %v108
    %v145 = vunpack.c.l.b16 %v109
    %v146 = vunpack.c.l.b16 %v110
    %v147 = vunpack.c.l.b16 %v111
    %v148 = vunpack.c.l.b16 %v112
    %v149 = vunpack.c.l.b16 %v113
    %v150 = vunpack.c.l.b16 %v114
    %v151 = vunpack.c.l.b16 %v115
    %v152 = vunpack.c.l.b16 %v116
    %v153 = vunpack.c.l.b16 %v117
    %v154 = vpack.c.b16 %v139, %v138
    %v155 = vpack.c.b16 %v141, %v140
    %v156 = vpack.c.b16 %v143, %v142
    %v157 = vpack.c.b16 %v145, %v144
    %v158 = vpack.c.b16 %v147, %v146
    %v159 = vpack.c.b16 %v149, %v148
    %v160 = vpack.c.b16 %v151, %v150
    %v161 = vpack.c.b16 %v153, %v152
    %170 = vmatpush.bf16.msra.mxu0 %v161
    %171 = vmatpush.bf16.msra.mxu0 %v160
    %172 = vmatpush.bf16.msra.mxu0 %v159
    %173 = vmatpush.bf16.msra.mxu0 %v158
    %174 = vmatpush.bf16.msra.mxu0 %v157
    %175 = vmatpush.bf16.msra.mxu0 %v156
    %176 = vmatpush.bf16.msra.mxu0 %v155
    %177 = vmatpush.bf16.msra.mxu0 %v154
    %178 = vmatmul.bf16.gmra.mxu0 %v101
    %v179 = vpop.f32.mrf.mxu0
    %v180 = vadd.f32 %v120, %v179
    %v181 = vpop.f32.mrf.mxu0
    %182 = vdwg.mxu0
    %v183 = vld [vmem:[#allocation2] sm:$0xff]
    %v184 = vld [vmem:[#allocation2 + $0x8] sm:$0xff]
    %v185 = vld [vmem:[#allocation2 + $0x10] sm:$0xff]
    %v186 = vld [vmem:[#allocation2 + $0x18] sm:$0xff]
    %v187 = vld [vmem:[#allocation8] sm:$0xf]
    %v188 = vld [vmem:[#allocation8 + $0x4] sm:$0xf]
    %v189 = vld [vmem:[#allocation8 + $0x8] sm:$0xf]
    %v190 = vld [vmem:[#allocation8 + $0xc] sm:$0xf]
    %v191 = vld [vmem:[#allocation8 + $0x10] sm:$0xf]
    %v192 = vld [vmem:[#allocation8 + $0x14] sm:$0xf]
    %v193 = vld [vmem:[#allocation8 + $0x18] sm:$0xf]
    %v194 = vld [vmem:[#allocation8 + $0x1c] sm:$0xf]
    %v195 = vld [vmem:[#allocation8 + $0x20] sm:$0xf]
    %v196 = vld [vmem:[#allocation8 + $0x24] sm:$0xf]
    %v197 = vld [vmem:[#allocation8 + $0x28] sm:$0xf]
    %v198 = vld [vmem:[#allocation8 + $0x2c] sm:$0xf]
    %v199 = vld [vmem:[#allocation8 + $0x30] sm:$0xf]
    %v200 = vld [vmem:[#allocation8 + $0x34] sm:$0xf]
    %v201 = vld [vmem:[#allocation8 + $0x38] sm:$0xf]
    %v202 = vld [vmem:[#allocation8 + $0x3c] sm:$0xf]
    %v203 = vld [vmem:[#allocation8 + $0x40] sm:$0xf]
    %v204 = vld [vmem:[#allocation8 + $0x44] sm:$0xf]
    %v205 = vld [vmem:[#allocation8 + $0x48] sm:$0xf]
    %v206 = vld [vmem:[#allocation8 + $0x4c] sm:$0xf]
    %v207 = vld [vmem:[#allocation8 + $0x50] sm:$0xf]
    %v208 = vld [vmem:[#allocation8 + $0x54] sm:$0xf]
    %v209 = vld [vmem:[#allocation8 + $0x58] sm:$0xf]
    %v210 = vld [vmem:[#allocation8 + $0x5c] sm:$0xf]
    %v211 = vld [vmem:[#allocation8 + $0x60] sm:$0xf]
    %v212 = vld [vmem:[#allocation8 + $0x64] sm:$0xf]
    %v213 = vld [vmem:[#allocation8 + $0x68] sm:$0xf]
    %v214 = vld [vmem:[#allocation8 + $0x6c] sm:$0xf]
    %v215 = vld [vmem:[#allocation8 + $0x70] sm:$0xf]
    %v216 = vld [vmem:[#allocation8 + $0x74] sm:$0xf]
    %v217 = vld [vmem:[#allocation8 + $0x78] sm:$0xf]
    %v218 = vld [vmem:[#allocation8 + $0x7c] sm:$0xf]
    %v219 = vld [vmem:[#allocation8 + $0x80] sm:$0xf]
    %v220 = vld [vmem:[#allocation8 + $0x84] sm:$0xf]
    %v221 = vld [vmem:[#allocation8 + $0x88] sm:$0xf]
    %v222 = vld [vmem:[#allocation8 + $0x8c] sm:$0xf]
    %v223 = vld [vmem:[#allocation8 + $0x90] sm:$0xf]
    %v224 = vld [vmem:[#allocation8 + $0x94] sm:$0xf]
    %v225 = vld [vmem:[#allocation8 + $0x98] sm:$0xf]
    %v226 = vld [vmem:[#allocation8 + $0x9c] sm:$0xf]
    %v227 = vld [vmem:[#allocation8 + $0xa0] sm:$0xf]
    %v228 = vld [vmem:[#allocation8 + $0xa4] sm:$0xf]
    %v229 = vld [vmem:[#allocation8 + $0xa8] sm:$0xf]
    %v230 = vld [vmem:[#allocation8 + $0xac] sm:$0xf]
    %v231 = vld [vmem:[#allocation8 + $0xb0] sm:$0xf]
    %v232 = vld [vmem:[#allocation8 + $0xb4] sm:$0xf]
    %v233 = vld [vmem:[#allocation8 + $0xb8] sm:$0xf]
    %v234 = vld [vmem:[#allocation8 + $0xbc] sm:$0xf]
    %v235 = vld [vmem:[#allocation8 + $0xc0] sm:$0xf]
    %v236 = vld [vmem:[#allocation8 + $0xc4] sm:$0xf]
    %v237 = vld [vmem:[#allocation8 + $0xc8] sm:$0xf]
    %v238 = vld [vmem:[#allocation8 + $0xcc] sm:$0xf]
    %v239 = vld [vmem:[#allocation8 + $0xd0] sm:$0xf]
    %v240 = vld [vmem:[#allocation8 + $0xd4] sm:$0xf]
    %v241 = vld [vmem:[#allocation8 + $0xd8] sm:$0xf]
    %v242 = vld [vmem:[#allocation8 + $0xdc] sm:$0xf]
    %v243 = vld [vmem:[#allocation8 + $0xe0] sm:$0xf]
    %v244 = vld [vmem:[#allocation8 + $0xe4] sm:$0xf]
    %v245 = vld [vmem:[#allocation8 + $0xe8] sm:$0xf]
    %v246 = vld [vmem:[#allocation8 + $0xec] sm:$0xf]
    %v247 = vld [vmem:[#allocation8 + $0xf0] sm:$0xf]
    %v248 = vld [vmem:[#allocation8 + $0xf4] sm:$0xf]
    %v249 = vld [vmem:[#allocation8 + $0xf8] sm:$0xf]
    %v250 = vld [vmem:[#allocation8 + $0xfc] sm:$0xf]
    %v251 = vld [vmem:[#allocation8 + $0x100] sm:$0xf]
    %v252 = vld [vmem:[#allocation8 + $0x104] sm:$0xf]
    %v253 = vld [vmem:[#allocation8 + $0x108] sm:$0xf]
    %v254 = vld [vmem:[#allocation8 + $0x10c] sm:$0xf]
    %v255 = vld [vmem:[#allocation8 + $0x110] sm:$0xf]
    %v256 = vld [vmem:[#allocation8 + $0x114] sm:$0xf]
    %v257 = vld [vmem:[#allocation8 + $0x118] sm:$0xf]
    %v258 = vld [vmem:[#allocation8 + $0x11c] sm:$0xf]
    %v259 = vld [vmem:[#allocation8 + $0x120] sm:$0xf]
    %v260 = vld [vmem:[#allocation8 + $0x124] sm:$0xf]
    %v261 = vld [vmem:[#allocation8 + $0x128] sm:$0xf]
    %v262 = vld [vmem:[#allocation8 + $0x12c] sm:$0xf]
    %v263 = vld [vmem:[#allocation8 + $0x130] sm:$0xf]
    %v264 = vld [vmem:[#allocation8 + $0x134] sm:$0xf]
    %v265 = vld [vmem:[#allocation8 + $0x138] sm:$0xf]
    %v266 = vld [vmem:[#allocation8 + $0x13c] sm:$0xf]
    %v267 = vld [vmem:[#allocation8 + $0x140] sm:$0xf]
    %v268 = vld [vmem:[#allocation8 + $0x144] sm:$0xf]
    %v269 = vld [vmem:[#allocation8 + $0x148] sm:$0xf]
    %v270 = vld [vmem:[#allocation8 + $0x14c] sm:$0xf]
    %v271 = vld [vmem:[#allocation8 + $0x150] sm:$0xf]
    %v272 = vld [vmem:[#allocation8 + $0x154] sm:$0xf]
    %v273 = vld [vmem:[#allocation8 + $0x158] sm:$0xf]
    %v274 = vld [vmem:[#allocation8 + $0x15c] sm:$0xf]
    %v275 = vld [vmem:[#allocation8 + $0x160] sm:$0xf]
    %v276 = vld [vmem:[#allocation8 + $0x164] sm:$0xf]
    %v277 = vld [vmem:[#allocation8 + $0x168] sm:$0xf]
    %v278 = vld [vmem:[#allocation8 + $0x16c] sm:$0xf]
    %v279 = vld [vmem:[#allocation8 + $0x170] sm:$0xf]
    %v280 = vld [vmem:[#allocation8 + $0x174] sm:$0xf]
    %v281 = vld [vmem:[#allocation8 + $0x178] sm:$0xf]
    %v282 = vld [vmem:[#allocation8 + $0x17c] sm:$0xf]
    %v283 = vld [vmem:[#allocation8 + $0x180] sm:$0xf]
    %v284 = vld [vmem:[#allocation8 + $0x184] sm:$0xf]
    %v285 = vld [vmem:[#allocation8 + $0x188] sm:$0xf]
    %v286 = vld [vmem:[#allocation8 + $0x18c] sm:$0xf]
    %v287 = vld [vmem:[#allocation8 + $0x190] sm:$0xf]
    %v288 = vld [vmem:[#allocation8 + $0x194] sm:$0xf]
    %v289 = vld [vmem:[#allocation8 + $0x198] sm:$0xf]
    %v290 = vld [vmem:[#allocation8 + $0x19c] sm:$0xf]
    %v291 = vld [vmem:[#allocation8 + $0x1a0] sm:$0xf]
    %v292 = vld [vmem:[#allocation8 + $0x1a4] sm:$0xf]
    %v293 = vld [vmem:[#allocation8 + $0x1a8] sm:$0xf]
    %v294 = vld [vmem:[#allocation8 + $0x1ac] sm:$0xf]
    %v295 = vld [vmem:[#allocation8 + $0x1b0] sm:$0xf]
    %v296 = vld [vmem:[#allocation8 + $0x1b4] sm:$0xf]
    %v297 = vld [vmem:[#allocation8 + $0x1b8] sm:$0xf]
    %v298 = vld [vmem:[#allocation8 + $0x1bc] sm:$0xf]
    %v299 = vld [vmem:[#allocation8 + $0x1c0] sm:$0xf]
    %v300 = vld [vmem:[#allocation8 + $0x1c4] sm:$0xf]
    %v301 = vld [vmem:[#allocation8 + $0x1c8] sm:$0xf]
    %v302 = vld [vmem:[#allocation8 + $0x1cc] sm:$0xf]
    %v303 = vld [vmem:[#allocation8 + $0x1d0] sm:$0xf]
    %v304 = vld [vmem:[#allocation8 + $0x1d4] sm:$0xf]
    %v305 = vld [vmem:[#allocation8 + $0x1d8] sm:$0xf]
    %v306 = vld [vmem:[#allocation8 + $0x1dc] sm:$0xf]
    %v307 = vld [vmem:[#allocation8 + $0x1e0] sm:$0xf]
    %v308 = vld [vmem:[#allocation8 + $0x1e4] sm:$0xf]
    %v309 = vld [vmem:[#allocation8 + $0x1e8] sm:$0xf]
    %v310 = vld [vmem:[#allocation8 + $0x1ec] sm:$0xf]
    %v311 = vld [vmem:[#allocation8 + $0x1f0] sm:$0xf]
    %v312 = vld [vmem:[#allocation8 + $0x1f4] sm:$0xf]
    %v313 = vld [vmem:[#allocation8 + $0x1f8] sm:$0xf]
    %v314 = vld [vmem:[#allocation8 + $0x1fc] sm:$0xf]
    %v315 = vpack.c.bf16 %v180, %v180
    %v316 = vld [vmem:[#allocation10] sm:$0xf]
    %v317 = vld [vmem:[#allocation10 + $0x4] sm:$0xf]
    %v318 = vld [vmem:[#allocation10 + $0x8] sm:$0xf]
    %v319 = vld [vmem:[#allocation10 + $0xc] sm:$0xf]
    %v320 = vld [vmem:[#allocation10 + $0x10] sm:$0xf]
    %v321 = vld [vmem:[#allocation10 + $0x14] sm:$0xf]
    %v322 = vld [vmem:[#allocation10 + $0x18] sm:$0xf]
    %v323 = vld [vmem:[#allocation10 + $0x1c] sm:$0xf]
    %v324 = vld [vmem:[#allocation10 + $0x20] sm:$0xf]
    %v325 = vld [vmem:[#allocation10 + $0x24] sm:$0xf]
    %v326 = vld [vmem:[#allocation10 + $0x28] sm:$0xf]
    %v327 = vld [vmem:[#allocation10 + $0x2c] sm:$0xf]
    %v328 = vld [vmem:[#allocation10 + $0x30] sm:$0xf]
    %v329 = vld [vmem:[#allocation10 + $0x34] sm:$0xf]
    %v330 = vld [vmem:[#allocation10 + $0x38] sm:$0xf]
    %v331 = vld [vmem:[#allocation10 + $0x3c] sm:$0xf]
    %v348 = vunpack.c.l.b16 %v316
    %v349 = vunpack.c.l.b16 %v317
    %v350 = vunpack.c.l.b16 %v318
    %v351 = vunpack.c.l.b16 %v319
    %v352 = vunpack.c.l.b16 %v320
    %v353 = vunpack.c.l.b16 %v321
    %v354 = vunpack.c.l.b16 %v322
    %v355 = vunpack.c.l.b16 %v323
    %v356 = vunpack.c.l.b16 %v324
    %v357 = vunpack.c.l.b16 %v325
    %v358 = vunpack.c.l.b16 %v326
    %v359 = vunpack.c.l.b16 %v327
    %v360 = vunpack.c.l.b16 %v328
    %v361 = vunpack.c.l.b16 %v329
    %v362 = vunpack.c.l.b16 %v330
    %v363 = vunpack.c.l.b16 %v331
    %v364 = vpack.c.b16 %v349, %v348
    %v365 = vpack.c.b16 %v351, %v350
    %v366 = vpack.c.b16 %v353, %v352
    %v367 = vpack.c.b16 %v355, %v354
    %v368 = vpack.c.b16 %v357, %v356
    %v369 = vpack.c.b16 %v359, %v358
    %v370 = vpack.c.b16 %v361, %v360
    %v371 = vpack.c.b16 %v363, %v362
    %380 = vmatpush.bf16.msra.mxu0 %v371
    %381 = vmatpush.bf16.msra.mxu0 %v370
    %382 = vmatpush.bf16.msra.mxu0 %v369
    %383 = vmatpush.bf16.msra.mxu0 %v368
    %384 = vmatpush.bf16.msra.mxu0 %v367
    %385 = vmatpush.bf16.msra.mxu0 %v366
    %386 = vmatpush.bf16.msra.mxu0 %v365
    %387 = vmatpush.bf16.msra.mxu0 %v364
    %388 = vmatmul.bf16.gmra.mxu0 %v315
    %v389 = vpop.f32.mrf.mxu0
    %v390 = vadd.f32 0.0, %v389
    %v391 = vpop.f32.mrf.mxu0
    %392 = vdwg.mxu0
    %v397 = vunpack.c.l.b16 %v183
    %v398 = vunpack.c.h.b16 %v183
    %v399 = vunpack.c.l.b16 %v184
    %v400 = vunpack.c.h.b16 %v184
    %v401 = vunpack.c.l.b16 %v185
    %v402 = vunpack.c.h.b16 %v185
    %v403 = vunpack.c.l.b16 %v186
    %v404 = vunpack.c.h.b16 %v186
    %v405 = vpack.c.b16 %v397, %v397
    %v406 = vpack.c.b16 %v398, %v398
    %v407 = vpack.c.b16 %v399, %v399
    %v408 = vpack.c.b16 %v400, %v400
    %v409 = vpack.c.b16 %v401, %v401
    %v410 = vpack.c.b16 %v402, %v402
    %v411 = vpack.c.b16 %v403, %v403
    %v412 = vpack.c.b16 %v404, %v404
    %v549 = vunpack.c.l.b16 %v187
    %v550 = vunpack.c.l.b16 %v188
    %v551 = vunpack.c.l.b16 %v189
    %v552 = vunpack.c.l.b16 %v190
    %v553 = vunpack.c.l.b16 %v191
    %v554 = vunpack.c.l.b16 %v192
    %v555 = vunpack.c.l.b16 %v193
    %v556 = vunpack.c.l.b16 %v194
    %v557 = vunpack.c.l.b16 %v195
    %v558 = vunpack.c.l.b16 %v196
    %v559 = vunpack.c.l.b16 %v197
    %v560 = vunpack.c.l.b16 %v198
    %v561 = vunpack.c.l.b16 %v199
    %v562 = vunpack.c.l.b16 %v200
    %v563 = vunpack.c.l.b16 %v201
    %v564 = vunpack.c.l.b16 %v202
    %v565 = vunpack.c.l.b16 %v203
    %v566 = vunpack.c.l.b16 %v204
    %v567 = vunpack.c.l.b16 %v205
    %v568 = vunpack.c.l.b16 %v206
    %v569 = vunpack.c.l.b16 %v207
    %v570 = vunpack.c.l.b16 %v208
    %v571 = vunpack.c.l.b16 %v209
    %v572 = vunpack.c.l.b16 %v210
    %v573 = vunpack.c.l.b16 %v211
    %v574 = vunpack.c.l.b16 %v212
    %v575 = vunpack.c.l.b16 %v213
    %v576 = vunpack.c.l.b16 %v214
    %v577 = vunpack.c.l.b16 %v215
    %v578 = vunpack.c.l.b16 %v216
    %v579 = vunpack.c.l.b16 %v217
    %v580 = vunpack.c.l.b16 %v218
    %v581 = vunpack.c.l.b16 %v219
    %v582 = vunpack.c.l.b16 %v220
    %v583 = vunpack.c.l.b16 %v221
    %v584 = vunpack.c.l.b16 %v222
    %v585 = vunpack.c.l.b16 %v223
    %v586 = vunpack.c.l.b16 %v224
    %v587 = vunpack.c.l.b16 %v225
    %v588 = vunpack.c.l.b16 %v226
    %v589 = vunpack.c.l.b16 %v227
    %v590 = vunpack.c.l.b16 %v228
    %v591 = vunpack.c.l.b16 %v229
    %v592 = vunpack.c.l.b16 %v230
    %v593 = vunpack.c.l.b16 %v231
    %v594 = vunpack.c.l.b16 %v232
    %v595 = vunpack.c.l.b16 %v233
    %v596 = vunpack.c.l.b16 %v234
    %v597 = vunpack.c.l.b16 %v235
    %v598 = vunpack.c.l.b16 %v236
    %v599 = vunpack.c.l.b16 %v237
    %v600 = vunpack.c.l.b16 %v238
    %v601 = vunpack.c.l.b16 %v239
    %v602 = vunpack.c.l.b16 %v240
    %v603 = vunpack.c.l.b16 %v241
    %v604 = vunpack.c.l.b16 %v242
    %v605 = vunpack.c.l.b16 %v243
    %v606 = vunpack.c.l.b16 %v244
    %v607 = vunpack.c.l.b16 %v245
    %v608 = vunpack.c.l.b16 %v246
    %v609 = vunpack.c.l.b16 %v247
    %v610 = vunpack.c.l.b16 %v248
    %v611 = vunpack.c.l.b16 %v249
    %v612 = vunpack.c.l.b16 %v250
    %v613 = vunpack.c.l.b16 %v251
    %v614 = vunpack.c.l.b16 %v252
    %v615 = vunpack.c.l.b16 %v253
    %v616 = vunpack.c.l.b16 %v254
    %v617 = vunpack.c.l.b16 %v255
    %v618 = vunpack.c.l.b16 %v256
    %v619 = vunpack.c.l.b16 %v257
    %v620 = vunpack.c.l.b16 %v258
    %v621 = vunpack.c.l.b16 %v259
    %v622 = vunpack.c.l.b16 %v260
    %v623 = vunpack.c.l.b16 %v261
    %v624 = vunpack.c.l.b16 %v262
    %v625 = vunpack.c.l.b16 %v263
    %v626 = vunpack.c.l.b16 %v264
    %v627 = vunpack.c.l.b16 %v265
    %v628 = vunpack.c.l.b16 %v266
    %v629 = vunpack.c.l.b16 %v267
    %v630 = vunpack.c.l.b16 %v268
    %v631 = vunpack.c.l.b16 %v269
    %v632 = vunpack.c.l.b16 %v270
    %v633 = vunpack.c.l.b16 %v271
    %v634 = vunpack.c.l.b16 %v272
    %v635 = vunpack.c.l.b16 %v273
    %v636 = vunpack.c.l.b16 %v274
    %v637 = vunpack.c.l.b16 %v275
    %v638 = vunpack.c.l.b16 %v276
    %v639 = vunpack.c.l.b16 %v277
    %v640 = vunpack.c.l.b16 %v278
    %v641 = vunpack.c.l.b16 %v279
    %v642 = vunpack.c.l.b16 %v280
    %v643 = vunpack.c.l.b16 %v281
    %v644 = vunpack.c.l.b16 %v282
    %v645 = vunpack.c.l.b16 %v283
    %v646 = vunpack.c.l.b16 %v284
    %v647 = vunpack.c.l.b16 %v285
    %v648 = vunpack.c.l.b16 %v286
    %v649 = vunpack.c.l.b16 %v287
    %v650 = vunpack.c.l.b16 %v288
    %v651 = vunpack.c.l.b16 %v289
    %v652 = vunpack.c.l.b16 %v290
    %v653 = vunpack.c.l.b16 %v291
    %v654 = vunpack.c.l.b16 %v292
    %v655 = vunpack.c.l.b16 %v293
    %v656 = vunpack.c.l.b16 %v294
    %v657 = vunpack.c.l.b16 %v295
    %v658 = vunpack.c.l.b16 %v296
    %v659 = vunpack.c.l.b16 %v297
    %v660 = vunpack.c.l.b16 %v298
    %v661 = vunpack.c.l.b16 %v299
    %v662 = vunpack.c.l.b16 %v300
    %v663 = vunpack.c.l.b16 %v301
    %v664 = vunpack.c.l.b16 %v302
    %v665 = vunpack.c.l.b16 %v303
    %v666 = vunpack.c.l.b16 %v304
    %v667 = vunpack.c.l.b16 %v305
    %v668 = vunpack.c.l.b16 %v306
    %v669 = vunpack.c.l.b16 %v307
    %v670 = vunpack.c.l.b16 %v308
    %v671 = vunpack.c.l.b16 %v309
    %v672 = vunpack.c.l.b16 %v310
    %v673 = vunpack.c.l.b16 %v311
    %v674 = vunpack.c.l.b16 %v312
    %v675 = vunpack.c.l.b16 %v313
    %v676 = vunpack.c.l.b16 %v314
    %v677 = vpack.c.b16 %v550, %v549
    %v678 = vpack.c.b16 %v552, %v551
    %v679 = vpack.c.b16 %v554, %v553
    %v680 = vpack.c.b16 %v556, %v555
    %v681 = vpack.c.b16 %v558, %v557
    %v682 = vpack.c.b16 %v560, %v559
    %v683 = vpack.c.b16 %v562, %v561
    %v684 = vpack.c.b16 %v564, %v563
    %v685 = vpack.c.b16 %v566, %v565
    %v686 = vpack.c.b16 %v568, %v567
    %v687 = vpack.c.b16 %v570, %v569
    %v688 = vpack.c.b16 %v572, %v571
    %v689 = vpack.c.b16 %v574, %v573
    %v690 = vpack.c.b16 %v576, %v575
    %v691 = vpack.c.b16 %v578, %v577
    %v692 = vpack.c.b16 %v580, %v579
    %v693 = vpack.c.b16 %v582, %v581
    %v694 = vpack.c.b16 %v584, %v583
    %v695 = vpack.c.b16 %v586, %v585
    %v696 = vpack.c.b16 %v588, %v587
    %v697 = vpack.c.b16 %v590, %v589
    %v698 = vpack.c.b16 %v592, %v591
    %v699 = vpack.c.b16 %v594, %v593
    %v700 = vpack.c.b16 %v596, %v595
    %v701 = vpack.c.b16 %v598, %v597
    %v702 = vpack.c.b16 %v600, %v599
    %v703 = vpack.c.b16 %v602, %v601
    %v704 = vpack.c.b16 %v604, %v603
    %v705 = vpack.c.b16 %v606, %v605
    %v706 = vpack.c.b16 %v608, %v607
    %v707 = vpack.c.b16 %v610, %v609
    %v708 = vpack.c.b16 %v612, %v611
    %v709 = vpack.c.b16 %v614, %v613
    %v710 = vpack.c.b16 %v616, %v615
    %v711 = vpack.c.b16 %v618, %v617
    %v712 = vpack.c.b16 %v620, %v619
    %v713 = vpack.c.b16 %v622, %v621
    %v714 = vpack.c.b16 %v624, %v623
    %v715 = vpack.c.b16 %v626, %v625
    %v716 = vpack.c.b16 %v628, %v627
    %v717 = vpack.c.b16 %v630, %v629
    %v718 = vpack.c.b16 %v632, %v631
    %v719 = vpack.c.b16 %v634, %v633
    %v720 = vpack.c.b16 %v636, %v635
    %v721 = vpack.c.b16 %v638, %v637
    %v722 = vpack.c.b16 %v640, %v639
    %v723 = vpack.c.b16 %v642, %v641
    %v724 = vpack.c.b16 %v644, %v643
    %v725 = vpack.c.b16 %v646, %v645
    %v726 = vpack.c.b16 %v648, %v647
    %v727 = vpack.c.b16 %v650, %v649
    %v728 = vpack.c.b16 %v652, %v651
    %v729 = vpack.c.b16 %v654, %v653
    %v730 = vpack.c.b16 %v656, %v655
    %v731 = vpack.c.b16 %v658, %v657
    %v732 = vpack.c.b16 %v660, %v659
    %v733 = vpack.c.b16 %v662, %v661
    %v734 = vpack.c.b16 %v664, %v663
    %v735 = vpack.c.b16 %v666, %v665
    %v736 = vpack.c.b16 %v668, %v667
    %v737 = vpack.c.b16 %v670, %v669
    %v738 = vpack.c.b16 %v672, %v671
    %v739 = vpack.c.b16 %v674, %v673
    %v740 = vpack.c.b16 %v676, %v675
    %805 = vmatpush.bf16.msra.mxu0 %v684
    %806 = vmatpush.bf16.msra.mxu0 %v683
    %807 = vmatpush.bf16.msra.mxu0 %v682
    %808 = vmatpush.bf16.msra.mxu0 %v681
    %809 = vmatpush.bf16.msra.mxu0 %v680
    %810 = vmatpush.bf16.msra.mxu0 %v679
    %811 = vmatpush.bf16.msra.mxu0 %v678
    %812 = vmatpush.bf16.msra.mxu0 %v677
    %813 = vmatmul.bf16.gmra.mxu0 %v405
    %v814 = vpop.f32.mrf.mxu0
    %v815 = vadd.f32 %v390, %v814
    %v816 = vpop.f32.mrf.mxu0
    %817 = vdwg.mxu0
    %818 = vmatpush.bf16.msra.mxu0 %v692
    %819 = vmatpush.bf16.msra.mxu0 %v691
    %820 = vmatpush.bf16.msra.mxu0 %v690
    %821 = vmatpush.bf16.msra.mxu0 %v689
    %822 = vmatpush.bf16.msra.mxu0 %v688
    %823 = vmatpush.bf16.msra.mxu0 %v687
    %824 = vmatpush.bf16.msra.mxu0 %v686
    %825 = vmatpush.bf16.msra.mxu0 %v685
    %826 = vmatmul.bf16.gmra.mxu0 %v406
    %v827 = vpop.f32.mrf.mxu0
    %v828 = vadd.f32 %v815, %v827
    %v829 = vpop.f32.mrf.mxu0
    %830 = vdwg.mxu0
    %831 = vmatpush.bf16.msra.mxu0 %v700
    %832 = vmatpush.bf16.msra.mxu0 %v699
    %833 = vmatpush.bf16.msra.mxu0 %v698
    %834 = vmatpush.bf16.msra.mxu0 %v697
    %835 = vmatpush.bf16.msra.mxu0 %v696
    %836 = vmatpush.bf16.msra.mxu0 %v695
    %837 = vmatpush.bf16.msra.mxu0 %v694
    %838 = vmatpush.bf16.msra.mxu0 %v693
    %839 = vmatmul.bf16.gmra.mxu0 %v407
    %v840 = vpop.f32.mrf.mxu0
    %v841 = vadd.f32 %v828, %v840
    %v842 = vpop.f32.mrf.mxu0
    %843 = vdwg.mxu0
    %844 = vmatpush.bf16.msra.mxu0 %v708
    %845 = vmatpush.bf16.msra.mxu0 %v707
    %846 = vmatpush.bf16.msra.mxu0 %v706
    %847 = vmatpush.bf16.msra.mxu0 %v705
    %848 = vmatpush.bf16.msra.mxu0 %v704
    %849 = vmatpush.bf16.msra.mxu0 %v703
    %850 = vmatpush.bf16.msra.mxu0 %v702
    %851 = vmatpush.bf16.msra.mxu0 %v701
    %852 = vmatmul.bf16.gmra.mxu0 %v408
    %v853 = vpop.f32.mrf.mxu0
    %v854 = vadd.f32 %v841, %v853
    %v855 = vpop.f32.mrf.mxu0
    %856 = vdwg.mxu0
    %857 = vmatpush.bf16.msra.mxu0 %v716
    %858 = vmatpush.bf16.msra.mxu0 %v715
    %859 = vmatpush.bf16.msra.mxu0 %v714
    %860 = vmatpush.bf16.msra.mxu0 %v713
    %861 = vmatpush.bf16.msra.mxu0 %v712
    %862 = vmatpush.bf16.msra.mxu0 %v711
    %863 = vmatpush.bf16.msra.mxu0 %v710
    %864 = vmatpush.bf16.msra.mxu0 %v709
    %865 = vmatmul.bf16.gmra.mxu0 %v409
    %v866 = vpop.f32.mrf.mxu0
    %v867 = vadd.f32 %v854, %v866
    %v868 = vpop.f32.mrf.mxu0
    %869 = vdwg.mxu0
    %870 = vmatpush.bf16.msra.mxu0 %v724
    %871 = vmatpush.bf16.msra.mxu0 %v723
    %872 = vmatpush.bf16.msra.mxu0 %v722
    %873 = vmatpush.bf16.msra.mxu0 %v721
    %874 = vmatpush.bf16.msra.mxu0 %v720
    %875 = vmatpush.bf16.msra.mxu0 %v719
    %876 = vmatpush.bf16.msra.mxu0 %v718
    %877 = vmatpush.bf16.msra.mxu0 %v717
    %878 = vmatmul.bf16.gmra.mxu0 %v410
    %v879 = vpop.f32.mrf.mxu0
    %v880 = vadd.f32 %v867, %v879
    %v881 = vpop.f32.mrf.mxu0
    %882 = vdwg.mxu0
    %883 = vmatpush.bf16.msra.mxu0 %v732
    %884 = vmatpush.bf16.msra.mxu0 %v731
    %885 = vmatpush.bf16.msra.mxu0 %v730
    %886 = vmatpush.bf16.msra.mxu0 %v729
    %887 = vmatpush.bf16.msra.mxu0 %v728
    %888 = vmatpush.bf16.msra.mxu0 %v727
    %889 = vmatpush.bf16.msra.mxu0 %v726
    %890 = vmatpush.bf16.msra.mxu0 %v725
    %891 = vmatmul.bf16.gmra.mxu0 %v411
    %v892 = vpop.f32.mrf.mxu0
    %v893 = vadd.f32 %v880, %v892
    %v894 = vpop.f32.mrf.mxu0
    %895 = vdwg.mxu0
    %896 = vmatpush.bf16.msra.mxu0 %v740
    %897 = vmatpush.bf16.msra.mxu0 %v739
    %898 = vmatpush.bf16.msra.mxu0 %v738
    %899 = vmatpush.bf16.msra.mxu0 %v737
    %900 = vmatpush.bf16.msra.mxu0 %v736
    %901 = vmatpush.bf16.msra.mxu0 %v735
    %902 = vmatpush.bf16.msra.mxu0 %v734
    %903 = vmatpush.bf16.msra.mxu0 %v733
    %904 = vmatmul.bf16.gmra.mxu0 %v412
    %v905 = vpop.f32.mrf.mxu0
    %v906 = vadd.f32 %v893, %v905
    %v907 = vpop.f32.mrf.mxu0
    %908 = vdwg.mxu0
    %v909 = vld [vmem:[%s6] sm:$0x1]
    %v911 = vperm.slane %v909, 0
    %v913 = vadd.f32 %v906, %v911
    %914 = vmax.xlane.f32.xlu0 %v913
    %v915 = vpop.xlane.xlu0 %914
    %v916 = vsub.f32 %v913, %v915
    %v917 = vmul.f32 %v916, 1.442695
    %v918 = vpow.pop %v917
    %919 = vadd.xlane.f32.xlu0 %v918
    %v920 = vpop.xlane.xlu0 %919
    %v921 = vlog2.pop %v920
    %v922 = vmul.f32 %v921, 0.6931472
    %v923 = vsub.f32 %v916, %v922
    %924 = vst [vmem:[#allocation11] sm:$0xff] %v923
    // Predicated region
    $region50: #{tpu_custom_call.1} parent=1 // pred_check
      _
    $region51: #{tpu_custom_call.1} parent=1 // pred_check_branch
      %926 = sbr.rel (0) target = $region53
    $region52: #{tpu_custom_call.1} parent=1 // pred_region
      %928 = vsyncadd [#allocation4], 0
      %s930 = sshll.u32 [#allocation11], 4
      %s931 = int_to_ptr.vmem [resolvable:$true] %s930
      %s932 = sshll.u32 %s7, 4
      %s933 = int_to_ptr.hbm [resolvable:$true] %s932
      %935 = dma.vmem_to_hbm [thread:$0]  %s931, 128, %s933, [#allocation4]
    $region53: #{tpu_custom_call.1} parent=1 // pred_fallthru
      _
    // Predicated region
    $region54: #{tpu_custom_call.1} parent=1 // pred_check
      _
    $region55: #{tpu_custom_call.1} parent=1 // pred_check_branch
      %937 = sbr.rel (0) target = $region57
    $region56: #{tpu_custom_call.1} parent=1 // pred_region
      %939 = dma.done [#allocation4], 128
    $region57: #{tpu_custom_call.1} parent=1 // pred_fallthru
      _
    %940 = vsyncpa [#allocation3], 1
    %941 = vsyncpa [#allocation6], 1
    %942 = vsyncpa [#allocation9], 1
    %943 = vsyncpa [#allocation4], 1

// kernel: tpu_custom_call.1
$region0: #{tpu_custom_call.1}
  #allocation0 [shape = 'u32[]', space=smem, size = 0x4, offset = 0x4, fixed_abs, tag = 'smem constant byte address 0x4 - core index']
  #allocation1 [shape = 'u32[72,128]{1,0:T(1,128)}', space=vmem, size = 0x9000, scoped, tag = 'internal scratch']
  %s0 = inlined_call_operand.hbm [shape: bf16[8,1024], index: 0, kind: input, shape index: {}]
  %s1 = inlined_call_operand.hbm [shape: bf16[8,128], index: 1, kind: input, shape index: {}]
  %s2 = inlined_call_operand.hbm [shape: bf16[128,128], index: 2, kind: input, shape index: {}]
  %s3 = inlined_call_operand.vmem [shape: f32[1,128], index: 3, kind: input, shape index: {}]
  %s4 = inlined_call_operand.hbm [shape: bf16[1024,128], index: 4, kind: input, shape index: {}]
  %s5 = inlined_call_operand.hbm [shape: bf16[128,128], index: 5, kind: input, shape index: {}]
  %s6 = inlined_call_operand.vmem [shape: f32[1,128], index: 6, kind: input, shape index: {}]
  %s7 = inlined_call_operand.hbm [shape: f32[8,128], index: 7, kind: output, shape index: {}]
  %s8 = sld [smem:[#allocation0]]
  $region58: #{tpu_custom_call.1} parent=0
    _
  %s10 = ssub.s32 1, %s8
  %s11 = scalar_select 0, %s10, %s8
  $region1: #{tpu_custom_call.1} parent=0
    #allocation2 [shape = 'u8[16384]{0}', space=vmem, size = 0x4000, scoped, tag = 'input window, operand 0, single buffered']
    #allocation3 [shape = 's32[1]{0}', space=sflag, size = 0x4, scoped, tag = 'scoped memory for tpu_custom_call.1']
    #allocation4 [shape = 's32[1]{0}', space=sflag, size = 0x4, scoped, tag = 'scoped memory for tpu_custom_call.1']
    #allocation5 [shape = 'u8[2048]{0}', space=vmem, size = 0x800, scoped, tag = 'input window, operand 1, single buffered']
    #allocation6 [shape = 's32[1]{0}', space=sflag, size = 0x4, scoped, tag = 'scoped memory for tpu_custom_call.1']
    #allocation7 [shape = 'u8[32768]{0}', space=vmem, size = 0x8000, scoped, tag = 'input window, operand 2, single buffered']
    #allocation8 [shape = 'u8[262144]{0}', space=vmem, size = 0x40000, scoped, tag = 'input window, operand 4, single buffered']
    #allocation9 [shape = 's32[1]{0}', space=sflag, size = 0x4, scoped, tag = 'scoped memory for tpu_custom_call.1']
    #allocation10 [shape = 'u8[32768]{0}', space=vmem, size = 0x8000, scoped, tag = 'input window, operand 5, single buffered']
    #allocation11 [shape = 'u8[4096]{0}', space=vmem, size = 0x1000, scoped, tag = 'output window, operand 0, single buffered']
    %12 = vsyncpa [#allocation3], 0
    %13 = vsyncpa [#allocation6], 0
    %14 = vsyncpa [#allocation9], 0
    %15 = vsyncpa [#allocation4], 0
    // Predicated region
    $region2: #{tpu_custom_call.1} parent=1 // pred_check
      _
    $region3: #{tpu_custom_call.1} parent=1 // pred_check_branch
      %17 = sbr.rel (0) target = $region5
    $region4: #{tpu_custom_call.1} parent=1 // pred_region
      %19 = vsyncadd [#allocation3], 0
      %s21 = sshll.u32 %s0, 4
      %s22 = int_to_ptr.hbm [resolvable:$true] %s21
      %s23 = sshll.u32 [#allocation2], 4
      %s24 = int_to_ptr.vmem [resolvable:$true] %s23
      %26 = dma.hbm_to_vmem [thread:$0]  %s22, 512, %s24, [#allocation3]
    $region5: #{tpu_custom_call.1} parent=1 // pred_fallthru
      _
    // Predicated region
    $region6: #{tpu_custom_call.1} parent=1 // pred_check
      _
    $region7: #{tpu_custom_call.1} parent=1 // pred_check_branch
      %28 = sbr.rel (0) target = $region9
    $region8: #{tpu_custom_call.1} parent=1 // pred_region
      %30 = vsyncadd [#allocation6], 0
      %s32 = sshll.u32 %s1, 4
      %s33 = int_to_ptr.hbm [resolvable:$true] %s32
      %s34 = sshll.u32 [#allocation5], 4
      %s35 = int_to_ptr.vmem [resolvable:$true] %s34
      %37 = dma.hbm_to_vmem [thread:$0]  %s33, 64, %s35, [#allocation6]
    $region9: #{tpu_custom_call.1} parent=1 // pred_fallthru
      _
    // Predicated region
    $region10: #{tpu_custom_call.1} parent=1 // pred_check
      _
    $region11: #{tpu_custom_call.1} parent=1 // pred_check_branch
      %39 = sbr.rel (0) target = $region13
    $region12: #{tpu_custom_call.1} parent=1 // pred_region
      %41 = vsyncadd [#allocation6], 0
      %s42 = sshll.u32 %s2, 4
      %s43 = int_to_ptr.hbm [resolvable:$true] %s42
      %s44 = sshll.u32 [#allocation7], 4
      %s45 = int_to_ptr.vmem [resolvable:$true] %s44
      %50 = dma.hbm_to_vmem [thread:$0]  %s43, 1024, %s45, [#allocation6], 64, 64, 4
    $region13: #{tpu_custom_call.1} parent=1 // pred_fallthru
      _
    // Predicated region
    $region14: #{tpu_custom_call.1} parent=1 // pred_check
      _
    $region15: #{tpu_custom_call.1} parent=1 // pred_check_branch
      %52 = sbr.rel (0) target = $region17
    $region16: #{tpu_custom_call.1} parent=1 // pred_region
      _
    $region17: #{tpu_custom_call.1} parent=1 // pred_fallthru
      _
    // Predicated region
    $region18: #{tpu_custom_call.1} parent=1 // pred_check
      _
    $region19: #{tpu_custom_call.1} parent=1 // pred_check_branch
      %54 = sbr.rel (0) target = $region21
    $region20: #{tpu_custom_call.1} parent=1 // pred_region
      %56 = vsyncadd [#allocation9], 0
      %s57 = sshll.u32 %s4, 4
      %s58 = int_to_ptr.hbm [resolvable:$true] %s57
      %s59 = sshll.u32 [#allocation8], 4
      %s60 = int_to_ptr.vmem [resolvable:$true] %s59
      %65 = dma.hbm_to_vmem [thread:$0]  %s58, 8192, %s60, [#allocation9], 64, 64, 4
    $region21: #{tpu_custom_call.1} parent=1 // pred_fallthru
      _
    // Predicated region
    $region22: #{tpu_custom_call.1} parent=1 // pred_check
      _
    $region23: #{tpu_custom_call.1} parent=1 // pred_check_branch
      %67 = sbr.rel (0) target = $region25
    $region24: #{tpu_custom_call.1} parent=1 // pred_region
      %69 = vsyncadd [#allocation9], 0
      %s70 = sshll.u32 %s5, 4
      %s71 = int_to_ptr.hbm [resolvable:$true] %s70
      %s72 = sshll.u32 [#allocation10], 4
      %s73 = int_to_ptr.vmem [resolvable:$true] %s72
      %78 = dma.hbm_to_vmem [thread:$0]  %s71, 1024, %s73, [#allocation9], 64, 64, 4
    $region25: #{tpu_custom_call.1} parent=1 // pred_fallthru
      _
    // Predicated region
    $region26: #{tpu_custom_call.1} parent=1 // pred_check
      _
    $region27: #{tpu_custom_call.1} parent=1 // pred_check_branch
      %80 = sbr.rel (0) target = $region29
    $region28: #{tpu_custom_call.1} parent=1 // pred_region
      _
    $region29: #{tpu_custom_call.1} parent=1 // pred_fallthru
      _
    // Predicated region
    $region30: #{tpu_custom_call.1} parent=1 // pred_check
      _
    $region31: #{tpu_custom_call.1} parent=1 // pred_check_branch
      %82 = sbr.rel (0) target = $region33
    $region32: #{tpu_custom_call.1} parent=1 // pred_region
      %84 = dma.done [#allocation3], 512
    $region33: #{tpu_custom_call.1} parent=1 // pred_fallthru
      _
    // Predicated region
    $region34: #{tpu_custom_call.1} parent=1 // pred_check
      _
    $region35: #{tpu_custom_call.1} parent=1 // pred_check_branch
      %86 = sbr.rel (0) target = $region37
    $region36: #{tpu_custom_call.1} parent=1 // pred_region
      %88 = dma.done [#allocation6], 64
    $region37: #{tpu_custom_call.1} parent=1 // pred_fallthru
      _
    // Predicated region
    $region38: #{tpu_custom_call.1} parent=1 // pred_check
      _
    $region39: #{tpu_custom_call.1} parent=1 // pred_check_branch
      %90 = sbr.rel (0) target = $region41
    $region40: #{tpu_custom_call.1} parent=1 // pred_region
      %92 = dma.done [#allocation6], 1024
    $region41: #{tpu_custom_call.1} parent=1 // pred_fallthru
      _
    // Predicated region
    $region42: #{tpu_custom_call.1} parent=1 // pred_check
      _
    $region43: #{tpu_custom_call.1} parent=1 // pred_check_branch
      %94 = sbr.rel (0) target = $region45
    $region44: #{tpu_custom_call.1} parent=1 // pred_region
      %96 = dma.done [#allocation9], 8192
    $region45: #{tpu_custom_call.1} parent=1 // pred_fallthru
      _
    // Predicated region
    $region46: #{tpu_custom_call.1} parent=1 // pred_check
      _
    $region47: #{tpu_custom_call.1} parent=1 // pred_check_branch
      %98 = sbr.rel (0) target = $region49
    $region48: #{tpu_custom_call.1} parent=1 // pred_region
      %100 = dma.done [#allocation9], 1024
    $region49: #{tpu_custom_call.1} parent=1 // pred_fallthru
      _
    %v101 = vld [vmem:[#allocation5] sm:$0xf]
    %v102 = vld [vmem:[#allocation7] sm:$0xf]
    %v103 = vld [vmem:[#allocation7 + $0x4] sm:$0xf]
    %v104 = vld [vmem:[#allocation7 + $0x8] sm:$0xf]
    %v105 = vld [vmem:[#allocation7 + $0xc] sm:$0xf]
    %v106 = vld [vmem:[#allocation7 + $0x10] sm:$0xf]
    %v107 = vld [vmem:[#allocation7 + $0x14] sm:$0xf]
    %v108 = vld [vmem:[#allocation7 + $0x18] sm:$0xf]
    %v109 = vld [vmem:[#allocation7 + $0x1c] sm:$0xf]
    %v110 = vld [vmem:[#allocation7 + $0x20] sm:$0xf]
    %v111 = vld [vmem:[#allocation7 + $0x24] sm:$0xf]
    %v112 = vld [vmem:[#allocation7 + $0x28] sm:$0xf]
    %v113 = vld [vmem:[#allocation7 + $0x2c] sm:$0xf]
    %v114 = vld [vmem:[#allocation7 + $0x30] sm:$0xf]
    %v115 = vld [vmem:[#allocation7 + $0x34] sm:$0xf]
    %v116 = vld [vmem:[#allocation7 + $0x38] sm:$0xf]
    %v117 = vld [vmem:[#allocation7 + $0x3c] sm:$0xf]
    %v118 = vld [vmem:[%s3] sm:$0x1]
    %v120 = vperm.slane %v118, 0
    %v138 = vunpack.c.l.b16 %v102
    %v139 = vunpack.c.l.b16 %v103
    %v140 = vunpack.c.l.b16 %v104
    %v141 = vunpack.c.l.b16 %v105
    %v142 = vunpack.c.l.b16 %v106
    %v143 = vunpack.c.l.b16 %v107
    %v144 = vunpack.c.l.b16 %v108
    %v145 = vunpack.c.l.b16 %v109
    %v146 = vunpack.c.l.b16 %v110
    %v147 = vunpack.c.l.b16 %v111
    %v148 = vunpack.c.l.b16 %v112
    %v149 = vunpack.c.l.b16 %v113
    %v150 = vunpack.c.l.b16 %v114
    %v151 = vunpack.c.l.b16 %v115
    %v152 = vunpack.c.l.b16 %v116
    %v153 = vunpack.c.l.b16 %v117
    %v154 = vpack.c.b16 %v139, %v138
    %v155 = vpack.c.b16 %v141, %v140
    %v156 = vpack.c.b16 %v143, %v142
    %v157 = vpack.c.b16 %v145, %v144
    %v158 = vpack.c.b16 %v147, %v146
    %v159 = vpack.c.b16 %v149, %v148
    %v160 = vpack.c.b16 %v151, %v150
    %v161 = vpack.c.b16 %v153, %v152
    %170 = vmatpush.bf16.msra.mxu0 %v161
    %171 = vmatpush.bf16.msra.mxu0 %v160
    %172 = vmatpush.bf16.msra.mxu0 %v159
    %173 = vmatpush.bf16.msra.mxu0 %v158
    %174 = vmatpush.bf16.msra.mxu0 %v157
    %175 = vmatpush.bf16.msra.mxu0 %v156
    %176 = vmatpush.bf16.msra.mxu0 %v155
    %177 = vmatpush.bf16.msra.mxu0 %v154
    %178 = vmatmul.bf16.gmra.mxu0 %v101
    %v179 = vpop.f32.mrf.mxu0
    %v180 = vadd.f32 %v120, %v179
    %v181 = vpop.f32.mrf.mxu0
    %182 = vdwg.mxu0
    %v183 = vld [vmem:[#allocation2] sm:$0xff]
    %v184 = vld [vmem:[#allocation2 + $0x8] sm:$0xff]
    %v185 = vld [vmem:[#allocation2 + $0x10] sm:$0xff]
    %v186 = vld [vmem:[#allocation2 + $0x18] sm:$0xff]
    %v187 = vld [vmem:[#allocation8] sm:$0xf]
    %v188 = vld [vmem:[#allocation8 + $0x4] sm:$0xf]
    %v189 = vld [vmem:[#allocation8 + $0x8] sm:$0xf]
    %v190 = vld [vmem:[#allocation8 + $0xc] sm:$0xf]
    %v191 = vld [vmem:[#allocation8 + $0x10] sm:$0xf]
    %v192 = vld [vmem:[#allocation8 + $0x14] sm:$0xf]
    %v193 = vld [vmem:[#allocation8 + $0x18] sm:$0xf]
    %v194 = vld [vmem:[#allocation8 + $0x1c] sm:$0xf]
    %v195 = vld [vmem:[#allocation8 + $0x20] sm:$0xf]
    %v196 = vld [vmem:[#allocation8 + $0x24] sm:$0xf]
    %v197 = vld [vmem:[#allocation8 + $0x28] sm:$0xf]
    %v198 = vld [vmem:[#allocation8 + $0x2c] sm:$0xf]
    %v199 = vld [vmem:[#allocation8 + $0x30] sm:$0xf]
    %v200 = vld [vmem:[#allocation8 + $0x34] sm:$0xf]
    %v201 = vld [vmem:[#allocation8 + $0x38] sm:$0xf]
    %v202 = vld [vmem:[#allocation8 + $0x3c] sm:$0xf]
    %v203 = vld [vmem:[#allocation8 + $0x40] sm:$0xf]
    %v204 = vld [vmem:[#allocation8 + $0x44] sm:$0xf]
    %v205 = vld [vmem:[#allocation8 + $0x48] sm:$0xf]
    %v206 = vld [vmem:[#allocation8 + $0x4c] sm:$0xf]
    %v207 = vld [vmem:[#allocation8 + $0x50] sm:$0xf]
    %v208 = vld [vmem:[#allocation8 + $0x54] sm:$0xf]
    %v209 = vld [vmem:[#allocation8 + $0x58] sm:$0xf]
    %v210 = vld [vmem:[#allocation8 + $0x5c] sm:$0xf]
    %v211 = vld [vmem:[#allocation8 + $0x60] sm:$0xf]
    %v212 = vld [vmem:[#allocation8 + $0x64] sm:$0xf]
    %v213 = vld [vmem:[#allocation8 + $0x68] sm:$0xf]
    %v214 = vld [vmem:[#allocation8 + $0x6c] sm:$0xf]
    %v215 = vld [vmem:[#allocation8 + $0x70] sm:$0xf]
    %v216 = vld [vmem:[#allocation8 + $0x74] sm:$0xf]
    %v217 = vld [vmem:[#allocation8 + $0x78] sm:$0xf]
    %v218 = vld [vmem:[#allocation8 + $0x7c] sm:$0xf]
    %v219 = vld [vmem:[#allocation8 + $0x80] sm:$0xf]
    %v220 = vld [vmem:[#allocation8 + $0x84] sm:$0xf]
    %v221 = vld [vmem:[#allocation8 + $0x88] sm:$0xf]
    %v222 = vld [vmem:[#allocation8 + $0x8c] sm:$0xf]
    %v223 = vld [vmem:[#allocation8 + $0x90] sm:$0xf]
    %v224 = vld [vmem:[#allocation8 + $0x94] sm:$0xf]
    %v225 = vld [vmem:[#allocation8 + $0x98] sm:$0xf]
    %v226 = vld [vmem:[#allocation8 + $0x9c] sm:$0xf]
    %v227 = vld [vmem:[#allocation8 + $0xa0] sm:$0xf]
    %v228 = vld [vmem:[#allocation8 + $0xa4] sm:$0xf]
    %v229 = vld [vmem:[#allocation8 + $0xa8] sm:$0xf]
    %v230 = vld [vmem:[#allocation8 + $0xac] sm:$0xf]
    %v231 = vld [vmem:[#allocation8 + $0xb0] sm:$0xf]
    %v232 = vld [vmem:[#allocation8 + $0xb4] sm:$0xf]
    %v233 = vld [vmem:[#allocation8 + $0xb8] sm:$0xf]
    %v234 = vld [vmem:[#allocation8 + $0xbc] sm:$0xf]
    %v235 = vld [vmem:[#allocation8 + $0xc0] sm:$0xf]
    %v236 = vld [vmem:[#allocation8 + $0xc4] sm:$0xf]
    %v237 = vld [vmem:[#allocation8 + $0xc8] sm:$0xf]
    %v238 = vld [vmem:[#allocation8 + $0xcc] sm:$0xf]
    %v239 = vld [vmem:[#allocation8 + $0xd0] sm:$0xf]
    %v240 = vld [vmem:[#allocation8 + $0xd4] sm:$0xf]
    %v241 = vld [vmem:[#allocation8 + $0xd8] sm:$0xf]
    %v242 = vld [vmem:[#allocation8 + $0xdc] sm:$0xf]
    %v243 = vld [vmem:[#allocation8 + $0xe0] sm:$0xf]
    %v244 = vld [vmem:[#allocation8 + $0xe4] sm:$0xf]
    %v245 = vld [vmem:[#allocation8 + $0xe8] sm:$0xf]
    %v246 = vld [vmem:[#allocation8 + $0xec] sm:$0xf]
    %v247 = vld [vmem:[#allocation8 + $0xf0] sm:$0xf]
    %v248 = vld [vmem:[#allocation8 + $0xf4] sm:$0xf]
    %v249 = vld [vmem:[#allocation8 + $0xf8] sm:$0xf]
    %v250 = vld [vmem:[#allocation8 + $0xfc] sm:$0xf]
    %v251 = vld [vmem:[#allocation8 + $0x100] sm:$0xf]
    %v252 = vld [vmem:[#allocation8 + $0x104] sm:$0xf]
    %v253 = vld [vmem:[#allocation8 + $0x108] sm:$0xf]
    %v254 = vld [vmem:[#allocation8 + $0x10c] sm:$0xf]
    %v255 = vld [vmem:[#allocation8 + $0x110] sm:$0xf]
    %v256 = vld [vmem:[#allocation8 + $0x114] sm:$0xf]
    %v257 = vld [vmem:[#allocation8 + $0x118] sm:$0xf]
    %v258 = vld [vmem:[#allocation8 + $0x11c] sm:$0xf]
    %v259 = vld [vmem:[#allocation8 + $0x120] sm:$0xf]
    %v260 = vld [vmem:[#allocation8 + $0x124] sm:$0xf]
    %v261 = vld [vmem:[#allocation8 + $0x128] sm:$0xf]
    %v262 = vld [vmem:[#allocation8 + $0x12c] sm:$0xf]
    %v263 = vld [vmem:[#allocation8 + $0x130] sm:$0xf]
    %v264 = vld [vmem:[#allocation8 + $0x134] sm:$0xf]
    %v265 = vld [vmem:[#allocation8 + $0x138] sm:$0xf]
    %v266 = vld [vmem:[#allocation8 + $0x13c] sm:$0xf]
    %v267 = vld [vmem:[#allocation8 + $0x140] sm:$0xf]
    %v268 = vld [vmem:[#allocation8 + $0x144] sm:$0xf]
    %v269 = vld [vmem:[#allocation8 + $0x148] sm:$0xf]
    %v270 = vld [vmem:[#allocation8 + $0x14c] sm:$0xf]
    %v271 = vld [vmem:[#allocation8 + $0x150] sm:$0xf]
    %v272 = vld [vmem:[#allocation8 + $0x154] sm:$0xf]
    %v273 = vld [vmem:[#allocation8 + $0x158] sm:$0xf]
    %v274 = vld [vmem:[#allocation8 + $0x15c] sm:$0xf]
    %v275 = vld [vmem:[#allocation8 + $0x160] sm:$0xf]
    %v276 = vld [vmem:[#allocation8 + $0x164] sm:$0xf]
    %v277 = vld [vmem:[#allocation8 + $0x168] sm:$0xf]
    %v278 = vld [vmem:[#allocation8 + $0x16c] sm:$0xf]
    %v279 = vld [vmem:[#allocation8 + $0x170] sm:$0xf]
    %v280 = vld [vmem:[#allocation8 + $0x174] sm:$0xf]
    %v281 = vld [vmem:[#allocation8 + $0x178] sm:$0xf]
    %v282 = vld [vmem:[#allocation8 + $0x17c] sm:$0xf]
    %v283 = vld [vmem:[#allocation8 + $0x180] sm:$0xf]
    %v284 = vld [vmem:[#allocation8 + $0x184] sm:$0xf]
    %v285 = vld [vmem:[#allocation8 + $0x188] sm:$0xf]
    %v286 = vld [vmem:[#allocation8 + $0x18c] sm:$0xf]
    %v287 = vld [vmem:[#allocation8 + $0x190] sm:$0xf]
    %v288 = vld [vmem:[#allocation8 + $0x194] sm:$0xf]
    %v289 = vld [vmem:[#allocation8 + $0x198] sm:$0xf]
    %v290 = vld [vmem:[#allocation8 + $0x19c] sm:$0xf]
    %v291 = vld [vmem:[#allocation8 + $0x1a0] sm:$0xf]
    %v292 = vld [vmem:[#allocation8 + $0x1a4] sm:$0xf]
    %v293 = vld [vmem:[#allocation8 + $0x1a8] sm:$0xf]
    %v294 = vld [vmem:[#allocation8 + $0x1ac] sm:$0xf]
    %v295 = vld [vmem:[#allocation8 + $0x1b0] sm:$0xf]
    %v296 = vld [vmem:[#allocation8 + $0x1b4] sm:$0xf]
    %v297 = vld [vmem:[#allocation8 + $0x1b8] sm:$0xf]
    %v298 = vld [vmem:[#allocation8 + $0x1bc] sm:$0xf]
    %v299 = vld [vmem:[#allocation8 + $0x1c0] sm:$0xf]
    %v300 = vld [vmem:[#allocation8 + $0x1c4] sm:$0xf]
    %v301 = vld [vmem:[#allocation8 + $0x1c8] sm:$0xf]
    %v302 = vld [vmem:[#allocation8 + $0x1cc] sm:$0xf]
    %v303 = vld [vmem:[#allocation8 + $0x1d0] sm:$0xf]
    %v304 = vld [vmem:[#allocation8 + $0x1d4] sm:$0xf]
    %v305 = vld [vmem:[#allocation8 + $0x1d8] sm:$0xf]
    %v306 = vld [vmem:[#allocation8 + $0x1dc] sm:$0xf]
    %v307 = vld [vmem:[#allocation8 + $0x1e0] sm:$0xf]
    %v308 = vld [vmem:[#allocation8 + $0x1e4] sm:$0xf]
    %v309 = vld [vmem:[#allocation8 + $0x1e8] sm:$0xf]
    %v310 = vld [vmem:[#allocation8 + $0x1ec] sm:$0xf]
    %v311 = vld [vmem:[#allocation8 + $0x1f0] sm:$0xf]
    %v312 = vld [vmem:[#allocation8 + $0x1f4] sm:$0xf]
    %v313 = vld [vmem:[#allocation8 + $0x1f8] sm:$0xf]
    %v314 = vld [vmem:[#allocation8 + $0x1fc] sm:$0xf]
    %v315 = vpack.c.bf16 %v180, %v180
    %v316 = vld [vmem:[#allocation10] sm:$0xf]
    %v317 = vld [vmem:[#allocation10 + $0x4] sm:$0xf]
    %v318 = vld [vmem:[#allocation10 + $0x8] sm:$0xf]
    %v319 = vld [vmem:[#allocation10 + $0xc] sm:$0xf]
    %v320 = vld [vmem:[#allocation10 + $0x10] sm:$0xf]
    %v321 = vld [vmem:[#allocation10 + $0x14] sm:$0xf]
    %v322 = vld [vmem:[#allocation10 + $0x18] sm:$0xf]
    %v323 = vld [vmem:[#allocation10 + $0x1c] sm:$0xf]
    %v324 = vld [vmem:[#allocation10 + $0x20] sm:$0xf]
    %v325 = vld [vmem:[#allocation10 + $0x24] sm:$0xf]
    %v326 = vld [vmem:[#allocation10 + $0x28] sm:$0xf]
    %v327 = vld [vmem:[#allocation10 + $0x2c] sm:$0xf]
    %v328 = vld [vmem:[#allocation10 + $0x30] sm:$0xf]
    %v329 = vld [vmem:[#allocation10 + $0x34] sm:$0xf]
    %v330 = vld [vmem:[#allocation10 + $0x38] sm:$0xf]
    %v331 = vld [vmem:[#allocation10 + $0x3c] sm:$0xf]
    %v348 = vunpack.c.l.b16 %v316
    %v349 = vunpack.c.l.b16 %v317
    %v350 = vunpack.c.l.b16 %v318
    %v351 = vunpack.c.l.b16 %v319
    %v352 = vunpack.c.l.b16 %v320
    %v353 = vunpack.c.l.b16 %v321
    %v354 = vunpack.c.l.b16 %v322
    %v355 = vunpack.c.l.b16 %v323
    %v356 = vunpack.c.l.b16 %v324
    %v357 = vunpack.c.l.b16 %v325
    %v358 = vunpack.c.l.b16 %v326
    %v359 = vunpack.c.l.b16 %v327
    %v360 = vunpack.c.l.b16 %v328
    %v361 = vunpack.c.l.b16 %v329
    %v362 = vunpack.c.l.b16 %v330
    %v363 = vunpack.c.l.b16 %v331
    %v364 = vpack.c.b16 %v349, %v348
    %v365 = vpack.c.b16 %v351, %v350
    %v366 = vpack.c.b16 %v353, %v352
    %v367 = vpack.c.b16 %v355, %v354
    %v368 = vpack.c.b16 %v357, %v356
    %v369 = vpack.c.b16 %v359, %v358
    %v370 = vpack.c.b16 %v361, %v360
    %v371 = vpack.c.b16 %v363, %v362
    %380 = vmatpush.bf16.msra.mxu0 %v371
    %381 = vmatpush.bf16.msra.mxu0 %v370
    %382 = vmatpush.bf16.msra.mxu0 %v369
    %383 = vmatpush.bf16.msra.mxu0 %v368
    %384 = vmatpush.bf16.msra.mxu0 %v367
    %385 = vmatpush.bf16.msra.mxu0 %v366
    %386 = vmatpush.bf16.msra.mxu0 %v365
    %387 = vmatpush.bf16.msra.mxu0 %v364
    %388 = vmatmul.bf16.gmra.mxu0 %v315
    %v389 = vpop.f32.mrf.mxu0
    %v390 = vadd.f32 0.0, %v389
    %v391 = vpop.f32.mrf.mxu0
    %392 = vdwg.mxu0
    %v397 = vunpack.c.l.b16 %v183
    %v398 = vunpack.c.h.b16 %v183
    %v399 = vunpack.c.l.b16 %v184
    %v400 = vunpack.c.h.b16 %v184
    %v401 = vunpack.c.l.b16 %v185
    %v402 = vunpack.c.h.b16 %v185
    %v403 = vunpack.c.l.b16 %v186
    %v404 = vunpack.c.h.b16 %v186
    %v405 = vpack.c.b16 %v397, %v397
    %v406 = vpack.c.b16 %v398, %v398
    %v407 = vpack.c.b16 %v399, %v399
    %v408 = vpack.c.b16 %v400, %v400
    %v409 = vpack.c.b16 %v401, %v401
    %v410 = vpack.c.b16 %v402, %v402
    %v411 = vpack.c.b16 %v403, %v403
    %v412 = vpack.c.b16 %v404, %v404
    %v549 = vunpack.c.l.b16 %v187
    %v550 = vunpack.c.l.b16 %v188
    %v551 = vunpack.c.l.b16 %v189
    %v552 = vunpack.c.l.b16 %v190
    %v553 = vunpack.c.l.b16 %v191
    %v554 = vunpack.c.l.b16 %v192
    %v555 = vunpack.c.l.b16 %v193
    %v556 = vunpack.c.l.b16 %v194
    %v557 = vunpack.c.l.b16 %v195
    %v558 = vunpack.c.l.b16 %v196
    %v559 = vunpack.c.l.b16 %v197
    %v560 = vunpack.c.l.b16 %v198
    %v561 = vunpack.c.l.b16 %v199
    %v562 = vunpack.c.l.b16 %v200
    %v563 = vunpack.c.l.b16 %v201
    %v564 = vunpack.c.l.b16 %v202
    %v565 = vunpack.c.l.b16 %v203
    %v566 = vunpack.c.l.b16 %v204
    %v567 = vunpack.c.l.b16 %v205
    %v568 = vunpack.c.l.b16 %v206
    %v569 = vunpack.c.l.b16 %v207
    %v570 = vunpack.c.l.b16 %v208
    %v571 = vunpack.c.l.b16 %v209
    %v572 = vunpack.c.l.b16 %v210
    %v573 = vunpack.c.l.b16 %v211
    %v574 = vunpack.c.l.b16 %v212
    %v575 = vunpack.c.l.b16 %v213
    %v576 = vunpack.c.l.b16 %v214
    %v577 = vunpack.c.l.b16 %v215
    %v578 = vunpack.c.l.b16 %v216
    %v579 = vunpack.c.l.b16 %v217
    %v580 = vunpack.c.l.b16 %v218
    %v581 = vunpack.c.l.b16 %v219
    %v582 = vunpack.c.l.b16 %v220
    %v583 = vunpack.c.l.b16 %v221
    %v584 = vunpack.c.l.b16 %v222
    %v585 = vunpack.c.l.b16 %v223
    %v586 = vunpack.c.l.b16 %v224
    %v587 = vunpack.c.l.b16 %v225
    %v588 = vunpack.c.l.b16 %v226
    %v589 = vunpack.c.l.b16 %v227
    %v590 = vunpack.c.l.b16 %v228
    %v591 = vunpack.c.l.b16 %v229
    %v592 = vunpack.c.l.b16 %v230
    %v593 = vunpack.c.l.b16 %v231
    %v594 = vunpack.c.l.b16 %v232
    %v595 = vunpack.c.l.b16 %v233
    %v596 = vunpack.c.l.b16 %v234
    %v597 = vunpack.c.l.b16 %v235
    %v598 = vunpack.c.l.b16 %v236
    %v599 = vunpack.c.l.b16 %v237
    %v600 = vunpack.c.l.b16 %v238
    %v601 = vunpack.c.l.b16 %v239
    %v602 = vunpack.c.l.b16 %v240
    %v603 = vunpack.c.l.b16 %v241
    %v604 = vunpack.c.l.b16 %v242
    %v605 = vunpack.c.l.b16 %v243
    %v606 = vunpack.c.l.b16 %v244
    %v607 = vunpack.c.l.b16 %v245
    %v608 = vunpack.c.l.b16 %v246
    %v609 = vunpack.c.l.b16 %v247
    %v610 = vunpack.c.l.b16 %v248
    %v611 = vunpack.c.l.b16 %v249
    %v612 = vunpack.c.l.b16 %v250
    %v613 = vunpack.c.l.b16 %v251
    %v614 = vunpack.c.l.b16 %v252
    %v615 = vunpack.c.l.b16 %v253
    %v616 = vunpack.c.l.b16 %v254
    %v617 = vunpack.c.l.b16 %v255
    %v618 = vunpack.c.l.b16 %v256
    %v619 = vunpack.c.l.b16 %v257
    %v620 = vunpack.c.l.b16 %v258
    %v621 = vunpack.c.l.b16 %v259
    %v622 = vunpack.c.l.b16 %v260
    %v623 = vunpack.c.l.b16 %v261
    %v624 = vunpack.c.l.b16 %v262
    %v625 = vunpack.c.l.b16 %v263
    %v626 = vunpack.c.l.b16 %v264
    %v627 = vunpack.c.l.b16 %v265
    %v628 = vunpack.c.l.b16 %v266
    %v629 = vunpack.c.l.b16 %v267
    %v630 = vunpack.c.l.b16 %v268
    %v631 = vunpack.c.l.b16 %v269
    %v632 = vunpack.c.l.b16 %v270
    %v633 = vunpack.c.l.b16 %v271
    %v634 = vunpack.c.l.b16 %v272
    %v635 = vunpack.c.l.b16 %v273
    %v636 = vunpack.c.l.b16 %v274
    %v637 = vunpack.c.l.b16 %v275
    %v638 = vunpack.c.l.b16 %v276
    %v639 = vunpack.c.l.b16 %v277
    %v640 = vunpack.c.l.b16 %v278
    %v641 = vunpack.c.l.b16 %v279
    %v642 = vunpack.c.l.b16 %v280
    %v643 = vunpack.c.l.b16 %v281
    %v644 = vunpack.c.l.b16 %v282
    %v645 = vunpack.c.l.b16 %v283
    %v646 = vunpack.c.l.b16 %v284
    %v647 = vunpack.c.l.b16 %v285
    %v648 = vunpack.c.l.b16 %v286
    %v649 = vunpack.c.l.b16 %v287
    %v650 = vunpack.c.l.b16 %v288
    %v651 = vunpack.c.l.b16 %v289
    %v652 = vunpack.c.l.b16 %v290
    %v653 = vunpack.c.l.b16 %v291
    %v654 = vunpack.c.l.b16 %v292
    %v655 = vunpack.c.l.b16 %v293
    %v656 = vunpack.c.l.b16 %v294
    %v657 = vunpack.c.l.b16 %v295
    %v658 = vunpack.c.l.b16 %v296
    %v659 = vunpack.c.l.b16 %v297
    %v660 = vunpack.c.l.b16 %v298
    %v661 = vunpack.c.l.b16 %v299
    %v662 = vunpack.c.l.b16 %v300
    %v663 = vunpack.c.l.b16 %v301
    %v664 = vunpack.c.l.b16 %v302
    %v665 = vunpack.c.l.b16 %v303
    %v666 = vunpack.c.l.b16 %v304
    %v667 = vunpack.c.l.b16 %v305
    %v668 = vunpack.c.l.b16 %v306
    %v669 = vunpack.c.l.b16 %v307
    %v670 = vunpack.c.l.b16 %v308
    %v671 = vunpack.c.l.b16 %v309
    %v672 = vunpack.c.l.b16 %v310
    %v673 = vunpack.c.l.b16 %v311
    %v674 = vunpack.c.l.b16 %v312
    %v675 = vunpack.c.l.b16 %v313
    %v676 = vunpack.c.l.b16 %v314
    %v677 = vpack.c.b16 %v550, %v549
    %v678 = vpack.c.b16 %v552, %v551
    %v679 = vpack.c.b16 %v554, %v553
    %v680 = vpack.c.b16 %v556, %v555
    %v681 = vpack.c.b16 %v558, %v557
    %v682 = vpack.c.b16 %v560, %v559
    %v683 = vpack.c.b16 %v562, %v561
    %v684 = vpack.c.b16 %v564, %v563
    %v685 = vpack.c.b16 %v566, %v565
    %v686 = vpack.c.b16 %v568, %v567
    %v687 = vpack.c.b16 %v570, %v569
    %v688 = vpack.c.b16 %v572, %v571
    %v689 = vpack.c.b16 %v574, %v573
    %v690 = vpack.c.b16 %v576, %v575
    %v691 = vpack.c.b16 %v578, %v577
    %v692 = vpack.c.b16 %v580, %v579
    %v693 = vpack.c.b16 %v582, %v581
    %v694 = vpack.c.b16 %v584, %v583
    %v695 = vpack.c.b16 %v586, %v585
    %v696 = vpack.c.b16 %v588, %v587
    %v697 = vpack.c.b16 %v590, %v589
    %v698 = vpack.c.b16 %v592, %v591
    %v699 = vpack.c.b16 %v594, %v593
    %v700 = vpack.c.b16 %v596, %v595
    %v701 = vpack.c.b16 %v598, %v597
    %v702 = vpack.c.b16 %v600, %v599
    %v703 = vpack.c.b16 %v602, %v601
    %v704 = vpack.c.b16 %v604, %v603
    %v705 = vpack.c.b16 %v606, %v605
    %v706 = vpack.c.b16 %v608, %v607
    %v707 = vpack.c.b16 %v610, %v609
    %v708 = vpack.c.b16 %v612, %v611
    %v709 = vpack.c.b16 %v614, %v613
    %v710 = vpack.c.b16 %v616, %v615
    %v711 = vpack.c.b16 %v618, %v617
    %v712 = vpack.c.b16 %v620, %v619
    %v713 = vpack.c.b16 %v622, %v621
    %v714 = vpack.c.b16 %v624, %v623
    %v715 = vpack.c.b16 %v626, %v625
    %v716 = vpack.c.b16 %v628, %v627
    %v717 = vpack.c.b16 %v630, %v629
    %v718 = vpack.c.b16 %v632, %v631
    %v719 = vpack.c.b16 %v634, %v633
    %v720 = vpack.c.b16 %v636, %v635
    %v721 = vpack.c.b16 %v638, %v637
    %v722 = vpack.c.b16 %v640, %v639
    %v723 = vpack.c.b16 %v642, %v641
    %v724 = vpack.c.b16 %v644, %v643
    %v725 = vpack.c.b16 %v646, %v645
    %v726 = vpack.c.b16 %v648, %v647
    %v727 = vpack.c.b16 %v650, %v649
    %v728 = vpack.c.b16 %v652, %v651
    %v729 = vpack.c.b16 %v654, %v653
    %v730 = vpack.c.b16 %v656, %v655
    %v731 = vpack.c.b16 %v658, %v657
    %v732 = vpack.c.b16 %v660, %v659
    %v733 = vpack.c.b16 %v662, %v661
    %v734 = vpack.c.b16 %v664, %v663
    %v735 = vpack.c.b16 %v666, %v665
    %v736 = vpack.c.b16 %v668, %v667
    %v737 = vpack.c.b16 %v670, %v669
    %v738 = vpack.c.b16 %v672, %v671
    %v739 = vpack.c.b16 %v674, %v673
    %v740 = vpack.c.b16 %v676, %v675
    %805 = vmatpush.bf16.msra.mxu0 %v684
    %806 = vmatpush.bf16.msra.mxu0 %v683
    %807 = vmatpush.bf16.msra.mxu0 %v682
    %808 = vmatpush.bf16.msra.mxu0 %v681
    %809 = vmatpush.bf16.msra.mxu0 %v680
    %810 = vmatpush.bf16.msra.mxu0 %v679
    %811 = vmatpush.bf16.msra.mxu0 %v678
    %812 = vmatpush.bf16.msra.mxu0 %v677
    %813 = vmatmul.bf16.gmra.mxu0 %v405
    %v814 = vpop.f32.mrf.mxu0
    %v815 = vadd.f32 %v390, %v814
    %v816 = vpop.f32.mrf.mxu0
    %817 = vdwg.mxu0
    %818 = vmatpush.bf16.msra.mxu0 %v692
    %819 = vmatpush.bf16.msra.mxu0 %v691
    %820 = vmatpush.bf16.msra.mxu0 %v690
    %821 = vmatpush.bf16.msra.mxu0 %v689
    %822 = vmatpush.bf16.msra.mxu0 %v688
    %823 = vmatpush.bf16.msra.mxu0 %v687
    %824 = vmatpush.bf16.msra.mxu0 %v686
    %825 = vmatpush.bf16.msra.mxu0 %v685
    %826 = vmatmul.bf16.gmra.mxu0 %v406
    %v827 = vpop.f32.mrf.mxu0
    %v828 = vadd.f32 %v815, %v827
    %v829 = vpop.f32.mrf.mxu0
    %830 = vdwg.mxu0
    %831 = vmatpush.bf16.msra.mxu0 %v700
    %832 = vmatpush.bf16.msra.mxu0 %v699
    %833 = vmatpush.bf16.msra.mxu0 %v698
    %834 = vmatpush.bf16.msra.mxu0 %v697
    %835 = vmatpush.bf16.msra.mxu0 %v696
    %836 = vmatpush.bf16.msra.mxu0 %v695
    %837 = vmatpush.bf16.msra.mxu0 %v694
    %838 = vmatpush.bf16.msra.mxu0 %v693
    %839 = vmatmul.bf16.gmra.mxu0 %v407
    %v840 = vpop.f32.mrf.mxu0
    %v841 = vadd.f32 %v828, %v840
    %v842 = vpop.f32.mrf.mxu0
    %843 = vdwg.mxu0
    %844 = vmatpush.bf16.msra.mxu0 %v708
    %845 = vmatpush.bf16.msra.mxu0 %v707
    %846 = vmatpush.bf16.msra.mxu0 %v706
    %847 = vmatpush.bf16.msra.mxu0 %v705
    %848 = vmatpush.bf16.msra.mxu0 %v704
    %849 = vmatpush.bf16.msra.mxu0 %v703
    %850 = vmatpush.bf16.msra.mxu0 %v702
    %851 = vmatpush.bf16.msra.mxu0 %v701
    %852 = vmatmul.bf16.gmra.mxu0 %v408
    %v853 = vpop.f32.mrf.mxu0
    %v854 = vadd.f32 %v841, %v853
    %v855 = vpop.f32.mrf.mxu0
    %856 = vdwg.mxu0
    %857 = vmatpush.bf16.msra.mxu0 %v716
    %858 = vmatpush.bf16.msra.mxu0 %v715
    %859 = vmatpush.bf16.msra.mxu0 %v714
    %860 = vmatpush.bf16.msra.mxu0 %v713
    %861 = vmatpush.bf16.msra.mxu0 %v712
    %862 = vmatpush.bf16.msra.mxu0 %v711
    %863 = vmatpush.bf16.msra.mxu0 %v710
    %864 = vmatpush.bf16.msra.mxu0 %v709
    %865 = vmatmul.bf16.gmra.mxu0 %v409
    %v866 = vpop.f32.mrf.mxu0
    %v867 = vadd.f32 %v854, %v866
    %v868 = vpop.f32.mrf.mxu0
    %869 = vdwg.mxu0
    %870 = vmatpush.bf16.msra.mxu0 %v724
    %871 = vmatpush.bf16.msra.mxu0 %v723
    %872 = vmatpush.bf16.msra.mxu0 %v722
    %873 = vmatpush.bf16.msra.mxu0 %v721
    %874 = vmatpush.bf16.msra.mxu0 %v720
    %875 = vmatpush.bf16.msra.mxu0 %v719
    %876 = vmatpush.bf16.msra.mxu0 %v718
    %877 = vmatpush.bf16.msra.mxu0 %v717
    %878 = vmatmul.bf16.gmra.mxu0 %v410
    %v879 = vpop.f32.mrf.mxu0
    %v880 = vadd.f32 %v867, %v879
    %v881 = vpop.f32.mrf.mxu0
    %882 = vdwg.mxu0
    %883 = vmatpush.bf16.msra.mxu0 %v732
    %884 = vmatpush.bf16.msra.mxu0 %v731
    %885 = vmatpush.bf16.msra.mxu0 %v730
    %886 = vmatpush.bf16.msra.mxu0 %v729
    %887 = vmatpush.bf16.msra.mxu0 %v728
    %888 = vmatpush.bf16.msra.mxu0 %v727
    %889 = vmatpush.bf16.msra.mxu0 %v726
    %890 = vmatpush.bf16.msra.mxu0 %v725
    %891 = vmatmul.bf16.gmra.mxu0 %v411
    %v892 = vpop.f32.mrf.mxu0
    %v893 = vadd.f32 %v880, %v892
    %v894 = vpop.f32.mrf.mxu0
    %895 = vdwg.mxu0
    %896 = vmatpush.bf16.msra.mxu0 %v740
    %897 = vmatpush.bf16.msra.mxu0 %v739
    %898 = vmatpush.bf16.msra.mxu0 %v738
    %899 = vmatpush.bf16.msra.mxu0 %v737
    %900 = vmatpush.bf16.msra.mxu0 %v736
    %901 = vmatpush.bf16.msra.mxu0 %v735
    %902 = vmatpush.bf16.msra.mxu0 %v734
    %903 = vmatpush.bf16.msra.mxu0 %v733
    %904 = vmatmul.bf16.gmra.mxu0 %v412
    %v905 = vpop.f32.mrf.mxu0
    %v906 = vadd.f32 %v893, %v905
    %v907 = vpop.f32.mrf.mxu0
    %908 = vdwg.mxu0
    %v909 = vld [vmem:[%s6] sm:$0x1]
    %v911 = vperm.slane %v909, 0
    %v913 = vadd.f32 %v906, %v911
    %914 = vmax.xlane.f32.xlu0 %v913
    %v915 = vpop.xlane.xlu0 %914
    %v916 = vsub.f32 %v913, %v915
    %v917 = vmul.f32 %v916, 1.442695
    %v918 = vpow.pop %v917
    %919 = vadd.xlane.f32.xlu0 %v918
    %v920 = vpop.xlane.xlu0 %919
    %v921 = vlog2.pop %v920
    %v922 = vmul.f32 %v921, 0.6931472
    %v923 = vsub.f32 %v916, %v922
    %924 = vst [vmem:[#allocation11] sm:$0xff] %v923
    // Predicated region
    $region50: #{tpu_custom_call.1} parent=1 // pred_check
      _
    $region51: #{tpu_custom_call.1} parent=1 // pred_check_branch
      %926 = sbr.rel (0) target = $region53
    $region52: #{tpu_custom_call.1} parent=1 // pred_region
      %928 = vsyncadd [#allocation4], 0
      %s930 = sshll.u32 [#allocation11], 4
      %s931 = int_to_ptr.vmem [resolvable:$true] %s930
      %s932 = sshll.u32 %s7, 4
      %s933 = int_to_ptr.hbm [resolvable:$true] %s932
      %935 = dma.vmem_to_hbm [thread:$0]  %s931, 128, %s933, [#allocation4]
    $region53: #{tpu_custom_call.1} parent=1 // pred_fallthru
      _
    // Predicated region
    $region54: #{tpu_custom_call.1} parent=1 // pred_check
      _
    $region55: #{tpu_custom_call.1} parent=1 // pred_check_branch
      %937 = sbr.rel (0) target = $region57
    $region56: #{tpu_custom_call.1} parent=1 // pred_region
      %939 = dma.done [#allocation4], 128
    $region57: #{tpu_custom_call.1} parent=1 // pred_fallthru
      _
    %940 = vsyncpa [#allocation3], 1
    %941 = vsyncpa [#allocation6], 1
    %942 = vsyncpa [#allocation9], 1
    %943 = vsyncpa [#allocation4], 1

</llo_original>
